<compile_context>
chip_gen: v7x
topology: tpu7x:2x2x1
jax: 0.10.0
libtpu: 0.0.40
codegen_flags: <defaults>
</compile_context>

<pallas_src>
import functools

import jax
import jax.numpy as jnp
from jax.experimental import pallas as pl
from jax.experimental.pallas import tpu as pltpu


def _vq_kernel(z_ref, e_ref, et_ref, esq_ref, zq_ref, idx_ref, sse_ref):
    """One spatial tile (all batches): nearest-code lookup + quantized write + SSE partials.

    z_ref  : (B, D, T) f32   channel-major activation tile (T spatial columns)
    e_ref  : (K, D)    f32   codebook
    et_ref : (D, K)    f32   codebook transposed (precomputed in wrapper)
    esq_ref: (K, 1)    f32   per-code squared norms (precomputed in wrapper)
    zq_ref : (B, D, T) f32   quantized output tile (straight-through forward value)
    idx_ref: (B, 1, T) i32   argmin codebook indices
    sse_ref: (1, T)    f32   per-column partial sums of (z_q - z)^2
    """
    e = e_ref[...]          # (K, D)
    e_t = et_ref[...]       # (D, K)
    e_sq = esq_ref[...]     # (K, 1)
    B = z_ref.shape[0]
    K = e.shape[0]

    sse_cols = None
    for b in range(B):  # B is small & static; unrolled at trace time
        zb = z_ref[b]                                             # (D, T)

        # Reduced distance: ||e||^2 - 2 e.z  (the per-column ||z||^2 term is constant
        # per column and does not change the argmin).
        cross = jnp.dot(e, zb, preferred_element_type=jnp.float32)  # MXU (K, T)
        dist = e_sq - 2.0 * cross                                    # (K, T)

        # First-occurrence argmin along the code (sublane) axis.
        min_d = jnp.min(dist, axis=0, keepdims=True)                 # (1, T)
        k_iota = jax.lax.broadcasted_iota(jnp.int32, dist.shape, 0)  # (K, T)
        idx = jnp.min(jnp.where(dist <= min_d, k_iota, K),
                      axis=0, keepdims=True)                         # (1, T) i32

        # Codebook gather via one-hot matmul (MXU-friendly).
        onehot = (k_iota == idx).astype(jnp.float32)                 # (K, T)
        zq_b = jnp.dot(e_t, onehot, preferred_element_type=jnp.float32)  # (D, T)

        diff = zq_b - zb
        part = jnp.sum(diff * diff, axis=0, keepdims=True)           # (1, T)
        sse_cols = part if sse_cols is None else sse_cols + part

        # Straight-through forward value is exactly z_q.
        zq_ref[b] = zq_b.astype(zq_ref.dtype)
        idx_ref[b] = idx

    sse_ref[...] = sse_cols


def _choose_tile(hw: int, requested: int) -> int:
    """Largest spatial tile <= requested that divides hw and is lane-dense (or full)."""
    t = min(requested, hw)
    for c in range(t, 0, -1):
        if hw % c == 0 and (c % 128 == 0 or c == hw):
            return c
    return hw


@functools.partial(jax.jit, static_argnames=("beta", "tile_t"))
def vector_quantize(z_nchw, codebook, beta=0.25, tile_t=512):
    """Forward pass of VectorQuantizer (no EMA buffer update).

    z_nchw:   (B, C, H, W) float32, C == embedding_dim
    codebook: (K, C) float32 (nn.Embedding weight)
    Returns (z_q_nchw, vq_loss, encoding_indices) matching the PyTorch module.
    """
    B, C, H, W = z_nchw.shape
    D = C
    K = codebook.shape[0]
    HW = H * W

    T = _choose_tile(HW, tile_t)
    grid = (HW // T,)

    # NCHW-native channel-major view: free reshape, no transpose.
    z3 = z_nchw.reshape(B, D, HW).astype(jnp.float32)
    e = codebook.astype(jnp.float32)                      # (K, D)
    e_t = e.T                                             # (D, K) tiny, done once
    e_sq = jnp.sum(e * e, axis=1, keepdims=True)          # (K, 1) done once

    out_shapes = (
        jax.ShapeDtypeStruct((B, D, HW), jnp.float32),    # z_q, channel-major
        jax.ShapeDtypeStruct((B, 1, HW), jnp.int32),      # indices, lane-dense
        jax.ShapeDtypeStruct((1, HW), jnp.float32),       # per-column SSE partials
    )

    grid_spec = pltpu.PrefetchScalarGridSpec(
        num_scalar_prefetch=0,
        grid=grid,
        in_specs=[
            pl.BlockSpec((B, D, T), lambda i: (0, 0, i)),  # z tile
            pl.BlockSpec((K, D), lambda i: (0, 0)),        # codebook (resident)
            pl.BlockSpec((D, K), lambda i: (0, 0)),        # codebook^T (resident)
            pl.BlockSpec((K, 1), lambda i: (0, 0)),        # ||e||^2 (resident)
        ],
        out_specs=[
            pl.BlockSpec((B, D, T), lambda i: (0, 0, i)),  # z_q tile (lane-dense)
            pl.BlockSpec((B, 1, T), lambda i: (0, 0, i)),  # indices tile
            pl.BlockSpec((1, T), lambda i: (0, i)),        # SSE partials tile
        ],
    )

    flops = 4 * B * HW * K * D  # two (K,D)x(D,T)-class matmuls per column
    bytes_accessed = (2 * B * D * HW + 2 * K * D + K + HW) * 4 + B * HW * 4
    cost = pl.CostEstimate(flops=flops, transcendentals=0,
                           bytes_accessed=bytes_accessed)

    zq3, idx3, sse_cols = pl.pallas_call(
        _vq_kernel,
        out_shape=out_shapes,
        grid_spec=grid_spec,
        compiler_params=pltpu.CompilerParams(
            dimension_semantics=("parallel",)),   # no cross-step deps -> megacore-friendly
        cost_estimate=cost,
    )(z3, e, e_t, e_sq)

    sse = jnp.sum(sse_cols)
    mse = sse / jnp.float32(B * HW * D)
    vq_loss = (1.0 + beta) * mse          # beta*mse(z.detach(), z_q) + mse(z, z_q.detach())

    z_q = zq3.reshape(B, D, H, W)         # free reshape: already NCHW
    encoding_indices = idx3.reshape(-1)   # (B*H*W,), matches NHWC-flatten row order
    return z_q, vq_loss, encoding_indices


def _reference(z_nchw, codebook, beta=0.25):
    """Pure-JAX reference mirroring the PyTorch forward (for verification)."""
    B, C, H, W = z_nchw.shape
    z = jnp.transpose(z_nchw, (0, 2, 3, 1))
    z_flat = z.reshape(-1, C)
    dist = (jnp.sum(z_flat ** 2, axis=1, keepdims=True)
            + jnp.sum(codebook ** 2, axis=1)
            - 2.0 * z_flat @ codebook.T)
    idx = jnp.argmin(dist, axis=1)
    z_q = codebook[idx].reshape(z.shape)
    mse = jnp.mean((z - z_q) ** 2)
    vq_loss = beta * mse + mse
    z_q = z + (z_q - z)
    return jnp.transpose(z_q, (0, 3, 1, 2)), vq_loss, idx.astype(jnp.int32)


if __name__ == "__main__":
    # Small, module-consistent shapes: embedding_dim = C = 32, K = 128 codes.
    B, C, H, W = 2, 32, 16, 16
    num_embeddings = 128
    beta = 0.25

    key = jax.random.PRNGKey(0)
    kz, ke = jax.random.split(key)
    z = jax.random.normal(kz, (B, C, H, W), dtype=jnp.float32)
    # nn.Embedding weight init: uniform(-1/K, 1/K)
    codebook = jax.random.uniform(
        ke, (num_embeddings, C), dtype=jnp.float32,
        minval=-1.0 / num_embeddings, maxval=1.0 / num_embeddings)

    z_q, vq_loss, indices = vector_quantize(z, codebook, beta=beta)
    jax.block_until_ready((z_q, vq_loss, indices))

    z_q_ref, vq_loss_ref, idx_ref = _reference(z, codebook, beta=beta)
    assert z_q.shape == (B, C, H, W) and indices.shape == (B * H * W,)
    assert jnp.allclose(z_q, z_q_ref, atol=1e-5, rtol=1e-5)
    assert jnp.allclose(vq_loss, vq_loss_ref, atol=1e-5, rtol=1e-5)
    assert jnp.array_equal(indices, idx_ref)

    # TODO(synk): EMA codebook update (training-only, stateful buffer mutation) is not
    # part of the inference forward pass and is intentionally left out of the kernel.
    print("KERNEL_OK")
</pallas_src>

<mosaic_0001>
module attributes {stable_mosaic.version = 11 : i64} {
  func.func @_vq_kernel(%arg0: i32, %arg1: memref<2x32x256xf32, #tpu.memory_space<vmem>>, %arg2: memref<128x32xf32, #tpu.memory_space<vmem>>, %arg3: memref<32x128xf32, #tpu.memory_space<vmem>>, %arg4: memref<128x1xf32, #tpu.memory_space<vmem>>, %arg5: memref<2x32x256xf32, #tpu.memory_space<vmem>>, %arg6: memref<2x1x256xi32, #tpu.memory_space<vmem>>, %arg7: memref<1x256xf32, #tpu.memory_space<vmem>>) attributes {dimension_semantics = [#tpu.dimension_semantics<parallel>], iteration_bounds = array<i64: 1>, scalar_prefetch = 0 : i64, scratch_operands = 0 : i64, tpu.core_type = #tpu.core_type<tc>, window_params = [{transform_indices = @transform_0, window_bounds = array<i64: 2, 32, 256>}, {pipeline_mode = #tpu.pipeline_mode<synchronous>, transform_indices = @transform_1, window_bounds = array<i64: 128, 32>}, {pipeline_mode = #tpu.pipeline_mode<synchronous>, transform_indices = @transform_2, window_bounds = array<i64: 32, 128>}, {pipeline_mode = #tpu.pipeline_mode<synchronous>, transform_indices = @transform_3, window_bounds = array<i64: 128, 1>}, {transform_indices = @transform_4, window_bounds = array<i64: 2, 32, 256>}, {transform_indices = @transform_5, window_bounds = array<i64: 2, 1, 256>}, {transform_indices = @transform_6, window_bounds = array<i64: 1, 256>}]} {
    %c0 = arith.constant 0 : index
    %c0_0 = arith.constant 0 : index
    %0 = vector.load %arg2[%c0, %c0_0] : memref<128x32xf32, #tpu.memory_space<vmem>>, vector<128x32xf32>
    %c0_1 = arith.constant 0 : index
    %c0_2 = arith.constant 0 : index
    %1 = vector.load %arg3[%c0_1, %c0_2] : memref<32x128xf32, #tpu.memory_space<vmem>>, vector<32x128xf32>
    %c0_3 = arith.constant 0 : index
    %c0_4 = arith.constant 0 : index
    %2 = vector.load %arg4[%c0_3, %c0_4] : memref<128x1xf32, #tpu.memory_space<vmem>>, vector<128x1xf32>
    %c0_5 = arith.constant 0 : index
    %c0_6 = arith.constant 0 : index
    %c0_7 = arith.constant 0 : index
    %3 = vector.load %arg1[%c0_5, %c0_6, %c0_7] : memref<2x32x256xf32, #tpu.memory_space<vmem>>, vector<1x32x256xf32>
    %4 = vector.shape_cast %3 : vector<1x32x256xf32> to vector<32x256xf32>
    %cst = arith.constant dense<0.000000e+00> : vector<128x256xf32>
    %5 = tpu.matmul %0, %4, %cst {dimension_numbers = #tpu.dot_dimension_numbers<[1], [0], [0], [1], [0, 0, 1, 1], [], []>} : vector<128x32xf32>, vector<32x256xf32>, vector<128x256xf32> -> vector<128x256xf32>
    %cst_8 = arith.constant 2.000000e+00 : f32
    %6 = vector.broadcast %cst_8 : f32 to vector<128x256xf32>
    %7 = arith.mulf %6, %5 : vector<128x256xf32>
    %8 = vector.broadcast %2 : vector<128x1xf32> to vector<128x256xf32>
    %9 = arith.subf %8, %7 : vector<128x256xf32>
    %cst_9 = arith.constant dense<0x7F800000> : vector<256xf32>
    %10 = vector.multi_reduction <minimumf>, %9, %cst_9 [0] : vector<128x256xf32> to vector<256xf32>
    %11 = vector.shape_cast %10 : vector<256xf32> to vector<1x256xf32>
    %12 = tpu.iota {dimensions = array<i32: 0>} : vector<128x256xi32>
    %13 = vector.broadcast %11 : vector<1x256xf32> to vector<128x256xf32>
    %14 = arith.cmpf ole, %9, %13 : vector<128x256xf32>
    %c128_i32 = arith.constant 128 : i32
    %15 = vector.broadcast %c128_i32 : i32 to vector<128x256xi32>
    %16 = arith.select %14, %12, %15 : vector<128x256xi1>, vector<128x256xi32>
    %cst_10 = arith.constant dense<2147483647> : vector<256xi32>
    %17 = vector.multi_reduction <minsi>, %16, %cst_10 [0] : vector<128x256xi32> to vector<256xi32>
    %18 = vector.shape_cast %17 : vector<256xi32> to vector<1x256xi32>
    %19 = vector.broadcast %18 : vector<1x256xi32> to vector<128x256xi32>
    %20 = arith.cmpi eq, %12, %19 : vector<128x256xi32>
    %21 = arith.extui %20 : vector<128x256xi1> to vector<128x256xi32>
    %22 = arith.sitofp %21 : vector<128x256xi32> to vector<128x256xf32>
    %cst_11 = arith.constant dense<0.000000e+00> : vector<32x256xf32>
    %23 = tpu.matmul %1, %22, %cst_11 {dimension_numbers = #tpu.dot_dimension_numbers<[1], [0], [0], [1], [0, 0, 1, 1], [], []>} : vector<32x128xf32>, vector<128x256xf32>, vector<32x256xf32> -> vector<32x256xf32>
    %24 = arith.subf %23, %4 : vector<32x256xf32>
    %25 = arith.mulf %24, %24 : vector<32x256xf32>
    %cst_12 = arith.constant dense<0.000000e+00> : vector<256xf32>
    %26 = vector.multi_reduction <add>, %25, %cst_12 [0] : vector<32x256xf32> to vector<256xf32>
    %27 = vector.shape_cast %26 : vector<256xf32> to vector<1x256xf32>
    %c0_13 = arith.constant 0 : index
    %c0_14 = arith.constant 0 : index
    %c0_15 = arith.constant 0 : index
    %28 = vector.load %arg5[%c0_13, %c0_14, %c0_15] : memref<2x32x256xf32, #tpu.memory_space<vmem>>, vector<1x32x256xf32>
    %29 = vector.shape_cast %28 : vector<1x32x256xf32> to vector<32x256xf32>
    %30 = vector.shape_cast %23 : vector<32x256xf32> to vector<1x32x256xf32>
    tpu.vector_store %arg5[%c0_13, %c0_14, %c0_15], %30 {strides = array<i32>} : memref<2x32x256xf32, #tpu.memory_space<vmem>>, vector<1x32x256xf32>,
    %c0_16 = arith.constant 0 : index
    %c0_17 = arith.constant 0 : index
    %c0_18 = arith.constant 0 : index
    %31 = vector.load %arg6[%c0_16, %c0_17, %c0_18] : memref<2x1x256xi32, #tpu.memory_space<vmem>>, vector<1x1x256xi32>
    %32 = vector.shape_cast %31 : vector<1x1x256xi32> to vector<1x256xi32>
    %33 = vector.shape_cast %18 : vector<1x256xi32> to vector<1x1x256xi32>
    tpu.vector_store %arg6[%c0_16, %c0_17, %c0_18], %33 {strides = array<i32>} : memref<2x1x256xi32, #tpu.memory_space<vmem>>, vector<1x1x256xi32>,
    %c1 = arith.constant 1 : index
    %c0_19 = arith.constant 0 : index
    %c0_20 = arith.constant 0 : index
    %34 = vector.load %arg1[%c1, %c0_19, %c0_20] : memref<2x32x256xf32, #tpu.memory_space<vmem>>, vector<1x32x256xf32>
    %35 = vector.shape_cast %34 : vector<1x32x256xf32> to vector<32x256xf32>
    %cst_21 = arith.constant dense<0.000000e+00> : vector<128x256xf32>
    %36 = tpu.matmul %0, %35, %cst_21 {dimension_numbers = #tpu.dot_dimension_numbers<[1], [0], [0], [1], [0, 0, 1, 1], [], []>} : vector<128x32xf32>, vector<32x256xf32>, vector<128x256xf32> -> vector<128x256xf32>
    %cst_22 = arith.constant 2.000000e+00 : f32
    %37 = vector.broadcast %cst_22 : f32 to vector<128x256xf32>
    %38 = arith.mulf %37, %36 : vector<128x256xf32>
    %39 = vector.broadcast %2 : vector<128x1xf32> to vector<128x256xf32>
    %40 = arith.subf %39, %38 : vector<128x256xf32>
    %cst_23 = arith.constant dense<0x7F800000> : vector<256xf32>
    %41 = vector.multi_reduction <minimumf>, %40, %cst_23 [0] : vector<128x256xf32> to vector<256xf32>
    %42 = vector.shape_cast %41 : vector<256xf32> to vector<1x256xf32>
    %43 = tpu.iota {dimensions = array<i32: 0>} : vector<128x256xi32>
    %44 = vector.broadcast %42 : vector<1x256xf32> to vector<128x256xf32>
    %45 = arith.cmpf ole, %40, %44 : vector<128x256xf32>
    %c128_i32_24 = arith.constant 128 : i32
    %46 = vector.broadcast %c128_i32_24 : i32 to vector<128x256xi32>
    %47 = arith.select %45, %43, %46 : vector<128x256xi1>, vector<128x256xi32>
    %cst_25 = arith.constant dense<2147483647> : vector<256xi32>
    %48 = vector.multi_reduction <minsi>, %47, %cst_25 [0] : vector<128x256xi32> to vector<256xi32>
    %49 = vector.shape_cast %48 : vector<256xi32> to vector<1x256xi32>
    %50 = vector.broadcast %49 : vector<1x256xi32> to vector<128x256xi32>
    %51 = arith.cmpi eq, %43, %50 : vector<128x256xi32>
    %52 = arith.extui %51 : vector<128x256xi1> to vector<128x256xi32>
    %53 = arith.sitofp %52 : vector<128x256xi32> to vector<128x256xf32>
    %cst_26 = arith.constant dense<0.000000e+00> : vector<32x256xf32>
    %54 = tpu.matmul %1, %53, %cst_26 {dimension_numbers = #tpu.dot_dimension_numbers<[1], [0], [0], [1], [0, 0, 1, 1], [], []>} : vector<32x128xf32>, vector<128x256xf32>, vector<32x256xf32> -> vector<32x256xf32>
    %55 = arith.subf %54, %35 : vector<32x256xf32>
    %56 = arith.mulf %55, %55 : vector<32x256xf32>
    %cst_27 = arith.constant dense<0.000000e+00> : vector<256xf32>
    %57 = vector.multi_reduction <add>, %56, %cst_27 [0] : vector<32x256xf32> to vector<256xf32>
    %58 = vector.shape_cast %57 : vector<256xf32> to vector<1x256xf32>
    %59 = arith.addf %27, %58 : vector<1x256xf32>
    %c1_28 = arith.constant 1 : index
    %c0_29 = arith.constant 0 : index
    %c0_30 = arith.constant 0 : index
    %60 = vector.load %arg5[%c1_28, %c0_29, %c0_30] : memref<2x32x256xf32, #tpu.memory_space<vmem>>, vector<1x32x256xf32>
    %61 = vector.shape_cast %60 : vector<1x32x256xf32> to vector<32x256xf32>
    %62 = vector.shape_cast %54 : vector<32x256xf32> to vector<1x32x256xf32>
    tpu.vector_store %arg5[%c1_28, %c0_29, %c0_30], %62 {strides = array<i32>} : memref<2x32x256xf32, #tpu.memory_space<vmem>>, vector<1x32x256xf32>,
    %c1_31 = arith.constant 1 : index
    %c0_32 = arith.constant 0 : index
    %c0_33 = arith.constant 0 : index
    %63 = vector.load %arg6[%c1_31, %c0_32, %c0_33] : memref<2x1x256xi32, #tpu.memory_space<vmem>>, vector<1x1x256xi32>
    %64 = vector.shape_cast %63 : vector<1x1x256xi32> to vector<1x256xi32>
    %65 = vector.shape_cast %49 : vector<1x256xi32> to vector<1x1x256xi32>
    tpu.vector_store %arg6[%c1_31, %c0_32, %c0_33], %65 {strides = array<i32>} : memref<2x1x256xi32, #tpu.memory_space<vmem>>, vector<1x1x256xi32>,
    %c0_34 = arith.constant 0 : index
    %c0_35 = arith.constant 0 : index
    %66 = vector.load %arg7[%c0_34, %c0_35] : memref<1x256xf32, #tpu.memory_space<vmem>>, vector<1x256xf32>
    tpu.vector_store %arg7[%c0_34, %c0_35], %59 {strides = array<i32>} : memref<1x256xf32, #tpu.memory_space<vmem>>, vector<1x256xf32>,
    return
  }
  func.func @transform_0(%arg0: i32) -> (i32, i32, i32) {
    %c0_i32 = arith.constant 0 : i32
    %c0_i32_0 = arith.constant 0 : i32
    %c0_i32_1 = arith.constant 0 : i32
    return %c0_i32, %c0_i32_0, %arg0 : i32, i32, i32
  }
  func.func @transform_1(%arg0: i32) -> (i32, i32) {
    %c0_i32 = arith.constant 0 : i32
    %c0_i32_0 = arith.constant 0 : i32
    %c0_i32_1 = arith.constant 0 : i32
    return %c0_i32, %c0_i32_0 : i32, i32
  }
  func.func @transform_2(%arg0: i32) -> (i32, i32) {
    %c0_i32 = arith.constant 0 : i32
    %c0_i32_0 = arith.constant 0 : i32
    %c0_i32_1 = arith.constant 0 : i32
    return %c0_i32, %c0_i32_0 : i32, i32
  }
  func.func @transform_3(%arg0: i32) -> (i32, i32) {
    %c0_i32 = arith.constant 0 : i32
    %c0_i32_0 = arith.constant 0 : i32
    %c0_i32_1 = arith.constant 0 : i32
    return %c0_i32, %c0_i32_0 : i32, i32
  }
  func.func @transform_4(%arg0: i32) -> (i32, i32, i32) {
    %c0_i32 = arith.constant 0 : i32
    %c0_i32_0 = arith.constant 0 : i32
    %c0_i32_1 = arith.constant 0 : i32
    return %c0_i32, %c0_i32_0, %arg0 : i32, i32, i32
  }
  func.func @transform_5(%arg0: i32) -> (i32, i32, i32) {
    %c0_i32 = arith.constant 0 : i32
    %c0_i32_0 = arith.constant 0 : i32
    %c0_i32_1 = arith.constant 0 : i32
    return %c0_i32, %c0_i32_0, %arg0 : i32, i32, i32
  }
  func.func @transform_6(%arg0: i32) -> (i32, i32) {
    %c0_i32 = arith.constant 0 : i32
    %c0_i32_0 = arith.constant 0 : i32
    return %c0_i32, %arg0 : i32, i32
  }
}

</mosaic_0001>

<llo_original>
// kernel: vector_quantize.1
$region0: #{vector_quantize.1}
  #allocation0 [shape = 'u32[]', space=smem, size = 0x4, offset = 0x4, fixed_abs, tag = 'smem constant byte address 0x4 - core index']
  #allocation1 [shape = 'u32[144,128]{1,0:T(1,128)}', space=vmem, size = 0x12000, scoped, tag = 'internal scratch']
  %s0 = inlined_call_operand.vmem [shape: f32[2,32,256], index: 0, kind: input, shape index: {}]
  %s1 = inlined_call_operand.vmem [shape: f32[128,32], index: 1, kind: input, shape index: {}]
  %s2 = inlined_call_operand.vmem [shape: f32[32,128], index: 2, kind: input, shape index: {}]
  %s3 = inlined_call_operand.vmem [shape: f32[128,1], index: 3, kind: input, shape index: {}]
  %s4 = inlined_call_operand.vmem [shape: f32[2,32,256], index: 4, kind: output, shape index: {0}]
  %s5 = inlined_call_operand.hbm [shape: s32[2,1,256], index: 5, kind: output, shape index: {1}]
  %s6 = inlined_call_operand.vmem [shape: f32[1,256], index: 6, kind: output, shape index: {2}]
  %7 = xla_tuple %s4, %s5, %s6
  %s8 = sld [smem:[#allocation0]]
  $region42: #{vector_quantize.1} parent=0
    _
  %s10 = ssub.s32 1, %s8
  %s11 = scalar_select 0, %s10, %s8
  $region1: #{vector_quantize.1} parent=0
    #allocation2 [shape = 'u8[2048]{0}', space=vmem, size = 0x800, scoped, tag = 'output window, operand 1, single buffered']
    #allocation3 [shape = 's32[1]{0}', space=sflag, size = 0x4, scoped, tag = 'scoped memory for vector_quantize.1']
    %12 = vsyncpa [#allocation3], 0
    // Predicated region
    $region2: #{vector_quantize.1} parent=1 // pred_check
      _
    $region3: #{vector_quantize.1} parent=1 // pred_check_branch
      %14 = sbr.rel (0) target = $region5
    $region4: #{vector_quantize.1} parent=1 // pred_region
      _
    $region5: #{vector_quantize.1} parent=1 // pred_fallthru
      _
    // Predicated region
    $region6: #{vector_quantize.1} parent=1 // pred_check
      _
    $region7: #{vector_quantize.1} parent=1 // pred_check_branch
      %16 = sbr.rel (0) target = $region9
    $region8: #{vector_quantize.1} parent=1 // pred_region
      _
    $region9: #{vector_quantize.1} parent=1 // pred_fallthru
      _
    // Predicated region
    $region10: #{vector_quantize.1} parent=1 // pred_check
      _
    $region11: #{vector_quantize.1} parent=1 // pred_check_branch
      %18 = sbr.rel (0) target = $region13
    $region12: #{vector_quantize.1} parent=1 // pred_region
      _
    $region13: #{vector_quantize.1} parent=1 // pred_fallthru
      _
    // Predicated region
    $region14: #{vector_quantize.1} parent=1 // pred_check
      _
    $region15: #{vector_quantize.1} parent=1 // pred_check_branch
      %20 = sbr.rel (0) target = $region17
    $region16: #{vector_quantize.1} parent=1 // pred_region
      _
    $region17: #{vector_quantize.1} parent=1 // pred_fallthru
      _
    %v21 = vld [vmem:[%s1] sm:$0xff]
    %v22 = vld [vmem:[%s1 + $0x8] sm:$0xff]
    %v23 = vld [vmem:[%s1 + $0x10] sm:$0xff]
    %v24 = vld [vmem:[%s1 + $0x18] sm:$0xff]
    %v25 = vld [vmem:[%s1 + $0x20] sm:$0xff]
    %v26 = vld [vmem:[%s1 + $0x28] sm:$0xff]
    %v27 = vld [vmem:[%s1 + $0x30] sm:$0xff]
    %v28 = vld [vmem:[%s1 + $0x38] sm:$0xff]
    %v29 = vld [vmem:[%s1 + $0x40] sm:$0xff]
    %v30 = vld [vmem:[%s1 + $0x48] sm:$0xff]
    %v31 = vld [vmem:[%s1 + $0x50] sm:$0xff]
    %v32 = vld [vmem:[%s1 + $0x58] sm:$0xff]
    %v33 = vld [vmem:[%s1 + $0x60] sm:$0xff]
    %v34 = vld [vmem:[%s1 + $0x68] sm:$0xff]
    %v35 = vld [vmem:[%s1 + $0x70] sm:$0xff]
    %v36 = vld [vmem:[%s1 + $0x78] sm:$0xff]
    %v37 = vld [vmem:[%s2] sm:$0xff]
    %v38 = vld [vmem:[%s2 + $0x8] sm:$0xff]
    %v39 = vld [vmem:[%s2 + $0x10] sm:$0xff]
    %v40 = vld [vmem:[%s2 + $0x18] sm:$0xff]
    %v41 = vld [vmem:[%s3] sm:$0xff]
    %v42 = vld [vmem:[%s3 + $0x8] sm:$0xff]
    %v43 = vld [vmem:[%s3 + $0x10] sm:$0xff]
    %v44 = vld [vmem:[%s3 + $0x18] sm:$0xff]
    %v45 = vld [vmem:[%s3 + $0x20] sm:$0xff]
    %v46 = vld [vmem:[%s3 + $0x28] sm:$0xff]
    %v47 = vld [vmem:[%s3 + $0x30] sm:$0xff]
    %v48 = vld [vmem:[%s3 + $0x38] sm:$0xff]
    %v49 = vld [vmem:[%s3 + $0x40] sm:$0xff]
    %v50 = vld [vmem:[%s3 + $0x48] sm:$0xff]
    %v51 = vld [vmem:[%s3 + $0x50] sm:$0xff]
    %v52 = vld [vmem:[%s3 + $0x58] sm:$0xff]
    %v53 = vld [vmem:[%s3 + $0x60] sm:$0xff]
    %v54 = vld [vmem:[%s3 + $0x68] sm:$0xff]
    %v55 = vld [vmem:[%s3 + $0x70] sm:$0xff]
    %v56 = vld [vmem:[%s3 + $0x78] sm:$0xff]
    %v57 = vld [vmem:[%s0] sm:$0xff]
    %v58 = vld [vmem:[%s0 + $0x8] sm:$0xff]
    %v59 = vld [vmem:[%s0 + $0x10] sm:$0xff]
    %v60 = vld [vmem:[%s0 + $0x18] sm:$0xff]
    %v61 = vld [vmem:[%s0 + $0x20] sm:$0xff]
    %v62 = vld [vmem:[%s0 + $0x28] sm:$0xff]
    %v63 = vld [vmem:[%s0 + $0x30] sm:$0xff]
    %v64 = vld [vmem:[%s0 + $0x38] sm:$0xff]
    %vm65 = vcmask 261120
    %v67 = vsel %vm65, %v21, 0
    %v70 = vsel %vm65, %v22, 0
    %v73 = vsel %vm65, %v23, 0
    %v76 = vsel %vm65, %v24, 0
    %v79 = vsel %vm65, %v25, 0
    %v82 = vsel %vm65, %v26, 0
    %v85 = vsel %vm65, %v27, 0
    %v88 = vsel %vm65, %v28, 0
    %v91 = vsel %vm65, %v29, 0
    %v94 = vsel %vm65, %v30, 0
    %v97 = vsel %vm65, %v31, 0
    %v100 = vsel %vm65, %v32, 0
    %v103 = vsel %vm65, %v33, 0
    %v106 = vsel %vm65, %v34, 0
    %v109 = vsel %vm65, %v35, 0
    %v112 = vsel %vm65, %v36, 0
    %114 = vmatprep.subr.mxu0 %v58
    %115 = vmatpush1.msra.mxu0 %v57
    %116 = vmatprep.subr.mxu0 %v60
    %117 = vmatpush1.msra.mxu0 %v59
    %118 = vmatprep.subr.mxu0 %v62
    %119 = vmatpush1.msra.mxu0 %v61
    %120 = vmatprep.subr.mxu0 %v64
    %121 = vmatpush1.msra.mxu0 %v63
    %122 = vmatprep.subr.mxu0 0.0
    %123 = vmatpush1.msra.mxu0 0.0
    %124 = vmatprep.subr.mxu0 0.0
    %125 = vmatpush1.msra.mxu0 0.0
    %126 = vmatprep.subr.mxu0 0.0
    %127 = vmatpush1.msra.mxu0 0.0
    %128 = vmatprep.subr.mxu0 0.0
    %129 = vmatpush1.msra.mxu0 0.0
    %130 = vmatprep.subr.mxu0 0.0
    %131 = vmatpush1.msra.mxu0 0.0
    %132 = vmatprep.subr.mxu0 0.0
    %133 = vmatpush1.msra.mxu0 0.0
    %134 = vmatprep.subr.mxu0 0.0
    %135 = vmatpush1.msra.mxu0 0.0
    %136 = vmatprep.subr.mxu0 0.0
    %137 = vmatpush1.msra.mxu0 0.0
    %138 = vmatprep.subr.mxu0 0.0
    %139 = vmatpush1.msra.mxu0 0.0
    %140 = vmatprep.subr.mxu0 0.0
    %141 = vmatpush1.msra.mxu0 0.0
    %142 = vmatprep.subr.mxu0 0.0
    %143 = vmatpush1.msra.mxu0 0.0
    %144 = vmatprep.subr.mxu0 0.0
    %145 = vmatpush1.msra.mxu0 0.0
    %146 = vmatprep.subr.mxu0 0.0
    %147 = vmatpush1.msra.mxu0 0.0
    %148 = vmatprep.subr.mxu0 0.0
    %149 = vmatpush1.msra.mxu0 0.0
    %150 = vmatprep.subr.mxu0 0.0
    %151 = vmatpush1.msra.mxu0 0.0
    %152 = vmatprep.subr.mxu0 0.0
    %153 = vmatpush1.msra.mxu0 0.0
    %154 = vmatprep.subr.mxu0 0.0
    %155 = vmatpush1.msra.mxu0 0.0
    %156 = vmatprep.subr.mxu0 0.0
    %157 = vmatpush1.msra.mxu0 0.0
    %158 = vmatprep.subr.mxu0 0.0
    %159 = vmatpush1.msra.mxu0 0.0
    %160 = vmatprep.subr.mxu0 0.0
    %161 = vmatpush1.msra.mxu0 0.0
    %162 = vmatprep.subr.mxu0 0.0
    %163 = vmatpush1.msra.mxu0 0.0
    %164 = vmatprep.subr.mxu0 0.0
    %165 = vmatpush1.msra.mxu0 0.0
    %166 = vmatprep.subr.mxu0 0.0
    %167 = vmatpush1.msra.mxu0 0.0
    %168 = vmatprep.subr.mxu0 0.0
    %169 = vmatpush1.msra.mxu0 0.0
    %170 = vmatprep.subr.mxu0 0.0
    %171 = vmatpush1.msra.mxu0 0.0
    %172 = vmatprep.subr.mxu0 0.0
    %173 = vmatpush1.msra.mxu0 0.0
    %174 = vmatprep.subr.mxu0 0.0
    %175 = vmatpush1.msra.mxu0 0.0
    %176 = vmatprep.subr.mxu0 0.0
    %177 = vmatpush1.msra.mxu0 0.0
    %178 = vmatprep.mubr.f32.mxu0 0.0
    %179 = vmatmul.mubr.f32.gmra.mrb[0].mxu0 %v67
    %v180 = vpop.f32.mrb[0].mxu0
    %v181 = vadd.f32 0.0, %v180
    %v182 = vpop.f32.mrb[0].mxu0
    %v183 = vadd.f32 0.0, %v182
    %184 = vmatprep.mubr.f32.mxu0 0.0
    %185 = vmatmul.mubr.f32.gmra.mrb[0].mxu0 %v70
    %v186 = vpop.f32.mrb[0].mxu0
    %v187 = vadd.f32 0.0, %v186
    %v188 = vpop.f32.mrb[0].mxu0
    %v189 = vadd.f32 0.0, %v188
    %190 = vmatprep.mubr.f32.mxu0 0.0
    %191 = vmatmul.mubr.f32.gmra.mrb[0].mxu0 %v73
    %v192 = vpop.f32.mrb[0].mxu0
    %v193 = vadd.f32 0.0, %v192
    %v194 = vpop.f32.mrb[0].mxu0
    %v195 = vadd.f32 0.0, %v194
    %196 = vmatprep.mubr.f32.mxu0 0.0
    %197 = vmatmul.mubr.f32.gmra.mrb[0].mxu0 %v76
    %v198 = vpop.f32.mrb[0].mxu0
    %v199 = vadd.f32 0.0, %v198
    %v200 = vpop.f32.mrb[0].mxu0
    %v201 = vadd.f32 0.0, %v200
    %202 = vmatprep.mubr.f32.mxu0 0.0
    %203 = vmatmul.mubr.f32.gmra.mrb[0].mxu0 %v79
    %v204 = vpop.f32.mrb[0].mxu0
    %v205 = vadd.f32 0.0, %v204
    %v206 = vpop.f32.mrb[0].mxu0
    %v207 = vadd.f32 0.0, %v206
    %208 = vmatprep.mubr.f32.mxu0 0.0
    %209 = vmatmul.mubr.f32.gmra.mrb[0].mxu0 %v82
    %v210 = vpop.f32.mrb[0].mxu0
    %v211 = vadd.f32 0.0, %v210
    %v212 = vpop.f32.mrb[0].mxu0
    %v213 = vadd.f32 0.0, %v212
    %214 = vmatprep.mubr.f32.mxu0 0.0
    %215 = vmatmul.mubr.f32.gmra.mrb[0].mxu0 %v85
    %v216 = vpop.f32.mrb[0].mxu0
    %v217 = vadd.f32 0.0, %v216
    %v218 = vpop.f32.mrb[0].mxu0
    %v219 = vadd.f32 0.0, %v218
    %220 = vmatprep.mubr.f32.mxu0 0.0
    %221 = vmatmul.mubr.f32.gmra.mrb[0].mxu0 %v88
    %v222 = vpop.f32.mrb[0].mxu0
    %v223 = vadd.f32 0.0, %v222
    %v224 = vpop.f32.mrb[0].mxu0
    %v225 = vadd.f32 0.0, %v224
    %226 = vmatprep.mubr.f32.mxu0 0.0
    %227 = vmatmul.mubr.f32.gmra.mrb[0].mxu0 %v91
    %v228 = vpop.f32.mrb[0].mxu0
    %v229 = vadd.f32 0.0, %v228
    %v230 = vpop.f32.mrb[0].mxu0
    %v231 = vadd.f32 0.0, %v230
    %232 = vmatprep.mubr.f32.mxu0 0.0
    %233 = vmatmul.mubr.f32.gmra.mrb[0].mxu0 %v94
    %v234 = vpop.f32.mrb[0].mxu0
    %v235 = vadd.f32 0.0, %v234
    %v236 = vpop.f32.mrb[0].mxu0
    %v237 = vadd.f32 0.0, %v236
    %238 = vmatprep.mubr.f32.mxu0 0.0
    %239 = vmatmul.mubr.f32.gmra.mrb[0].mxu0 %v97
    %v240 = vpop.f32.mrb[0].mxu0
    %v241 = vadd.f32 0.0, %v240
    %v242 = vpop.f32.mrb[0].mxu0
    %v243 = vadd.f32 0.0, %v242
    %244 = vmatprep.mubr.f32.mxu0 0.0
    %245 = vmatmul.mubr.f32.gmra.mrb[0].mxu0 %v100
    %v246 = vpop.f32.mrb[0].mxu0
    %v247 = vadd.f32 0.0, %v246
    %v248 = vpop.f32.mrb[0].mxu0
    %v249 = vadd.f32 0.0, %v248
    %250 = vmatprep.mubr.f32.mxu0 0.0
    %251 = vmatmul.mubr.f32.gmra.mrb[0].mxu0 %v103
    %v252 = vpop.f32.mrb[0].mxu0
    %v253 = vadd.f32 0.0, %v252
    %v254 = vpop.f32.mrb[0].mxu0
    %v255 = vadd.f32 0.0, %v254
    %256 = vmatprep.mubr.f32.mxu0 0.0
    %257 = vmatmul.mubr.f32.gmra.mrb[0].mxu0 %v106
    %v258 = vpop.f32.mrb[0].mxu0
    %v259 = vadd.f32 0.0, %v258
    %v260 = vpop.f32.mrb[0].mxu0
    %v261 = vadd.f32 0.0, %v260
    %262 = vmatprep.mubr.f32.mxu0 0.0
    %263 = vmatmul.mubr.f32.gmra.mrb[0].mxu0 %v109
    %v264 = vpop.f32.mrb[0].mxu0
    %v265 = vadd.f32 0.0, %v264
    %v266 = vpop.f32.mrb[0].mxu0
    %v267 = vadd.f32 0.0, %v266
    %268 = vmatprep.mubr.f32.mxu0 0.0
    %269 = vmatmul.mubr.f32.gmra.mrb[0].mxu0 %v112
    %v270 = vpop.f32.mrb[0].mxu0
    %v271 = vadd.f32 0.0, %v270
    %v272 = vpop.f32.mrb[0].mxu0
    %v273 = vadd.f32 0.0, %v272
    %274 = vdwg.mxu0
    %v275 = vmul.f32 %v181, 2.0
    %v276 = vmul.f32 %v183, 2.0
    %v277 = vmul.f32 %v187, 2.0
    %v278 = vmul.f32 %v189, 2.0
    %v279 = vmul.f32 %v193, 2.0
    %v280 = vmul.f32 %v195, 2.0
    %v281 = vmul.f32 %v199, 2.0
    %v282 = vmul.f32 %v201, 2.0
    %v283 = vmul.f32 %v205, 2.0
    %v284 = vmul.f32 %v207, 2.0
    %v285 = vmul.f32 %v211, 2.0
    %v286 = vmul.f32 %v213, 2.0
    %v287 = vmul.f32 %v217, 2.0
    %v288 = vmul.f32 %v219, 2.0
    %v289 = vmul.f32 %v223, 2.0
    %v290 = vmul.f32 %v225, 2.0
    %v291 = vmul.f32 %v229, 2.0
    %v292 = vmul.f32 %v231, 2.0
    %v293 = vmul.f32 %v235, 2.0
    %v294 = vmul.f32 %v237, 2.0
    %v295 = vmul.f32 %v241, 2.0
    %v296 = vmul.f32 %v243, 2.0
    %v297 = vmul.f32 %v247, 2.0
    %v298 = vmul.f32 %v249, 2.0
    %v299 = vmul.f32 %v253, 2.0
    %v300 = vmul.f32 %v255, 2.0
    %v301 = vmul.f32 %v259, 2.0
    %v302 = vmul.f32 %v261, 2.0
    %v303 = vmul.f32 %v265, 2.0
    %v304 = vmul.f32 %v267, 2.0
    %v305 = vmul.f32 %v271, 2.0
    %v306 = vmul.f32 %v273, 2.0
    %308 = vset.pattern.permute.xlu0 0
    %309 = vperm.xlu0 %308, %v41
    %v310 = vpop.permute.xlu0 %309
    %313 = vset.pattern.permute.xlu0 0
    %314 = vperm.xlu0 %313, %v42
    %v315 = vpop.permute.xlu0 %314
    %318 = vset.pattern.permute.xlu0 0
    %319 = vperm.xlu0 %318, %v43
    %v320 = vpop.permute.xlu0 %319
    %323 = vset.pattern.permute.xlu0 0
    %324 = vperm.xlu0 %323, %v44
    %v325 = vpop.permute.xlu0 %324
    %328 = vset.pattern.permute.xlu0 0
    %329 = vperm.xlu0 %328, %v45
    %v330 = vpop.permute.xlu0 %329
    %333 = vset.pattern.permute.xlu0 0
    %334 = vperm.xlu0 %333, %v46
    %v335 = vpop.permute.xlu0 %334
    %338 = vset.pattern.permute.xlu0 0
    %339 = vperm.xlu0 %338, %v47
    %v340 = vpop.permute.xlu0 %339
    %343 = vset.pattern.permute.xlu0 0
    %344 = vperm.xlu0 %343, %v48
    %v345 = vpop.permute.xlu0 %344
    %348 = vset.pattern.permute.xlu0 0
    %349 = vperm.xlu0 %348, %v49
    %v350 = vpop.permute.xlu0 %349
    %353 = vset.pattern.permute.xlu0 0
    %354 = vperm.xlu0 %353, %v50
    %v355 = vpop.permute.xlu0 %354
    %358 = vset.pattern.permute.xlu0 0
    %359 = vperm.xlu0 %358, %v51
    %v360 = vpop.permute.xlu0 %359
    %363 = vset.pattern.permute.xlu0 0
    %364 = vperm.xlu0 %363, %v52
    %v365 = vpop.permute.xlu0 %364
    %368 = vset.pattern.permute.xlu0 0
    %369 = vperm.xlu0 %368, %v53
    %v370 = vpop.permute.xlu0 %369
    %373 = vset.pattern.permute.xlu0 0
    %374 = vperm.xlu0 %373, %v54
    %v375 = vpop.permute.xlu0 %374
    %378 = vset.pattern.permute.xlu0 0
    %379 = vperm.xlu0 %378, %v55
    %v380 = vpop.permute.xlu0 %379
    %383 = vset.pattern.permute.xlu0 0
    %384 = vperm.xlu0 %383, %v56
    %v385 = vpop.permute.xlu0 %384
    %v387 = vsub.f32 %v310, %v275
    %v388 = vsub.f32 %v310, %v276
    %v389 = vsub.f32 %v315, %v277
    %v390 = vsub.f32 %v315, %v278
    %v391 = vsub.f32 %v320, %v279
    %v392 = vsub.f32 %v320, %v280
    %v393 = vsub.f32 %v325, %v281
    %v394 = vsub.f32 %v325, %v282
    %v395 = vsub.f32 %v330, %v283
    %v396 = vsub.f32 %v330, %v284
    %v397 = vsub.f32 %v335, %v285
    %v398 = vsub.f32 %v335, %v286
    %v399 = vsub.f32 %v340, %v287
    %v400 = vsub.f32 %v340, %v288
    %v401 = vsub.f32 %v345, %v289
    %v402 = vsub.f32 %v345, %v290
    %v403 = vsub.f32 %v350, %v291
    %v404 = vsub.f32 %v350, %v292
    %v405 = vsub.f32 %v355, %v293
    %v406 = vsub.f32 %v355, %v294
    %v407 = vsub.f32 %v360, %v295
    %v408 = vsub.f32 %v360, %v296
    %v409 = vsub.f32 %v365, %v297
    %v410 = vsub.f32 %v365, %v298
    %v411 = vsub.f32 %v370, %v299
    %v412 = vsub.f32 %v370, %v300
    %v413 = vsub.f32 %v375, %v301
    %v414 = vsub.f32 %v375, %v302
    %v415 = vsub.f32 %v380, %v303
    %v416 = vsub.f32 %v380, %v304
    %v417 = vsub.f32 %v385, %v305
    %v418 = vsub.f32 %v385, %v306
    %v419 = vmin.f32 %v387, %v391
    %v420 = vmin.f32 %v389, %v393
    %v421 = vmin.f32 %v419, %v395
    %v422 = vmin.f32 %v420, %v397
    %v423 = vmin.f32 %v421, %v399
    %v424 = vmin.f32 %v422, %v401
    %v425 = vmin.f32 %v423, %v403
    %v426 = vmin.f32 %v424, %v405
    %v427 = vmin.f32 %v425, %v407
    %v428 = vmin.f32 %v426, %v409
    %v429 = vmin.f32 %v427, %v411
    %v430 = vmin.f32 %v428, %v413
    %v431 = vmin.f32 %v429, %v415
    %v432 = vmin.f32 %v430, %v417
    %v433 = vmin.f32 %v431, %v432
    %v434 = vrot.slane %v433, 4
    %v435 = vmin.f32 %v433, %v434
    %v436 = vrot.slane %v435, 2
    %v437 = vmin.f32 %v435, %v436
    %v438 = vrot.slane %v437, 1
    %v439 = vmin.f32 %v437, %v438
    %v440 = vmin.f32 %v388, %v392
    %v441 = vmin.f32 %v390, %v394
    %v442 = vmin.f32 %v440, %v396
    %v443 = vmin.f32 %v441, %v398
    %v444 = vmin.f32 %v442, %v400
    %v445 = vmin.f32 %v443, %v402
    %v446 = vmin.f32 %v444, %v404
    %v447 = vmin.f32 %v445, %v406
    %v448 = vmin.f32 %v446, %v408
    %v449 = vmin.f32 %v447, %v410
    %v450 = vmin.f32 %v448, %v412
    %v451 = vmin.f32 %v449, %v414
    %v452 = vmin.f32 %v450, %v416
    %v453 = vmin.f32 %v451, %v418
    %v454 = vmin.f32 %v452, %v453
    %v455 = vrot.slane %v454, 4
    %v456 = vmin.f32 %v454, %v455
    %v457 = vrot.slane %v456, 2
    %v458 = vmin.f32 %v456, %v457
    %v459 = vrot.slane %v458, 1
    %v460 = vmin.f32 %v458, %v459
    %v461 = vlaneseq
    %v462 = vshrl.u32 %v461, 7
    %v463 = vadd.s32 %v462, 8
    %v464 = vadd.s32 %v462, 16
    %v465 = vadd.s32 %v462, 24
    %v466 = vadd.s32 %v462, 32
    %v467 = vadd.s32 %v462, 40
    %v468 = vadd.s32 %v462, 48
    %v469 = vadd.s32 %v462, 56
    %v470 = vadd.s32 %v462, 64
    %v471 = vadd.s32 %v462, 72
    %v472 = vadd.s32 %v462, 80
    %v473 = vadd.s32 %v462, 88
    %v474 = vadd.s32 %v462, 96
    %v475 = vadd.s32 %v462, 104
    %v476 = vadd.s32 %v462, 112
    %v477 = vadd.s32 %v462, 120
    %vm478 = vcmp.le.f32.partialorder %v387, %v439
    %vm479 = vcmp.le.f32.partialorder %v388, %v460
    %vm480 = vcmp.le.f32.partialorder %v389, %v439
    %vm481 = vcmp.le.f32.partialorder %v390, %v460
    %vm482 = vcmp.le.f32.partialorder %v391, %v439
    %vm483 = vcmp.le.f32.partialorder %v392, %v460
    %vm484 = vcmp.le.f32.partialorder %v393, %v439
    %vm485 = vcmp.le.f32.partialorder %v394, %v460
    %vm486 = vcmp.le.f32.partialorder %v395, %v439
    %vm487 = vcmp.le.f32.partialorder %v396, %v460
    %vm488 = vcmp.le.f32.partialorder %v397, %v439
    %vm489 = vcmp.le.f32.partialorder %v398, %v460
    %vm490 = vcmp.le.f32.partialorder %v399, %v439
    %vm491 = vcmp.le.f32.partialorder %v400, %v460
    %vm492 = vcmp.le.f32.partialorder %v401, %v439
    %vm493 = vcmp.le.f32.partialorder %v402, %v460
    %vm494 = vcmp.le.f32.partialorder %v403, %v439
    %vm495 = vcmp.le.f32.partialorder %v404, %v460
    %vm496 = vcmp.le.f32.partialorder %v405, %v439
    %vm497 = vcmp.le.f32.partialorder %v406, %v460
    %vm498 = vcmp.le.f32.partialorder %v407, %v439
    %vm499 = vcmp.le.f32.partialorder %v408, %v460
    %vm500 = vcmp.le.f32.partialorder %v409, %v439
    %vm501 = vcmp.le.f32.partialorder %v410, %v460
    %vm502 = vcmp.le.f32.partialorder %v411, %v439
    %vm503 = vcmp.le.f32.partialorder %v412, %v460
    %vm504 = vcmp.le.f32.partialorder %v413, %v439
    %vm505 = vcmp.le.f32.partialorder %v414, %v460
    %vm506 = vcmp.le.f32.partialorder %v415, %v439
    %vm507 = vcmp.le.f32.partialorder %v416, %v460
    %vm508 = vcmp.le.f32.partialorder %v417, %v439
    %vm509 = vcmp.le.f32.partialorder %v418, %v460
    %v510 = vsel %vm478, %v462, 128
    %v511 = vsel %vm479, %v462, 128
    %v512 = vsel %vm480, %v463, 128
    %v513 = vsel %vm481, %v463, 128
    %v514 = vsel %vm482, %v464, 128
    %v515 = vsel %vm483, %v464, 128
    %v516 = vsel %vm484, %v465, 128
    %v517 = vsel %vm485, %v465, 128
    %v518 = vsel %vm486, %v466, 128
    %v519 = vsel %vm487, %v466, 128
    %v520 = vsel %vm488, %v467, 128
    %v521 = vsel %vm489, %v467, 128
    %v522 = vsel %vm490, %v468, 128
    %v523 = vsel %vm491, %v468, 128
    %v524 = vsel %vm492, %v469, 128
    %v525 = vsel %vm493, %v469, 128
    %v526 = vsel %vm494, %v470, 128
    %v527 = vsel %vm495, %v470, 128
    %v528 = vsel %vm496, %v471, 128
    %v529 = vsel %vm497, %v471, 128
    %v530 = vsel %vm498, %v472, 128
    %v531 = vsel %vm499, %v472, 128
    %v532 = vsel %vm500, %v473, 128
    %v533 = vsel %vm501, %v473, 128
    %v534 = vsel %vm502, %v474, 128
    %v535 = vsel %vm503, %v474, 128
    %v536 = vsel %vm504, %v475, 128
    %v537 = vsel %vm505, %v475, 128
    %v538 = vsel %vm506, %v476, 128
    %v539 = vsel %vm507, %v476, 128
    %v540 = vsel %vm508, %v477, 128
    %v541 = vsel %vm509, %v477, 128
    %vm542 = vcmp.lt.s32.totalorder %v510, %v514
    %v543 = vsel %vm542, %v510, %v514
    %vm544 = vcmp.lt.s32.totalorder %v512, %v516
    %v545 = vsel %vm544, %v512, %v516
    %vm546 = vcmp.lt.s32.totalorder %v543, %v518
    %v547 = vsel %vm546, %v543, %v518
    %vm548 = vcmp.lt.s32.totalorder %v545, %v520
    %v549 = vsel %vm548, %v545, %v520
    %vm550 = vcmp.lt.s32.totalorder %v547, %v522
    %v551 = vsel %vm550, %v547, %v522
    %vm552 = vcmp.lt.s32.totalorder %v549, %v524
    %v553 = vsel %vm552, %v549, %v524
    %vm554 = vcmp.lt.s32.totalorder %v551, %v526
    %v555 = vsel %vm554, %v551, %v526
    %vm556 = vcmp.lt.s32.totalorder %v553, %v528
    %v557 = vsel %vm556, %v553, %v528
    %vm558 = vcmp.lt.s32.totalorder %v555, %v530
    %v559 = vsel %vm558, %v555, %v530
    %vm560 = vcmp.lt.s32.totalorder %v557, %v532
    %v561 = vsel %vm560, %v557, %v532
    %vm562 = vcmp.lt.s32.totalorder %v559, %v534
    %v563 = vsel %vm562, %v559, %v534
    %vm564 = vcmp.lt.s32.totalorder %v561, %v536
    %v565 = vsel %vm564, %v561, %v536
    %vm566 = vcmp.lt.s32.totalorder %v563, %v538
    %v567 = vsel %vm566, %v563, %v538
    %vm568 = vcmp.lt.s32.totalorder %v565, %v540
    %v569 = vsel %vm568, %v565, %v540
    %vm570 = vcmp.lt.s32.totalorder %v567, %v569
    %v571 = vsel %vm570, %v567, %v569
    %v572 = vrot.slane %v571, 4
    %vm573 = vcmp.lt.s32.totalorder %v571, %v572
    %v574 = vsel %vm573, %v571, %v572
    %v575 = vrot.slane %v574, 2
    %vm576 = vcmp.lt.s32.totalorder %v574, %v575
    %v577 = vsel %vm576, %v574, %v575
    %v578 = vrot.slane %v577, 1
    %vm579 = vcmp.lt.s32.totalorder %v577, %v578
    %v580 = vsel %vm579, %v577, %v578
    %vm581 = vcmp.lt.s32.totalorder %v511, %v515
    %v582 = vsel %vm581, %v511, %v515
    %vm583 = vcmp.lt.s32.totalorder %v513, %v517
    %v584 = vsel %vm583, %v513, %v517
    %vm585 = vcmp.lt.s32.totalorder %v582, %v519
    %v586 = vsel %vm585, %v582, %v519
    %vm587 = vcmp.lt.s32.totalorder %v584, %v521
    %v588 = vsel %vm587, %v584, %v521
    %vm589 = vcmp.lt.s32.totalorder %v586, %v523
    %v590 = vsel %vm589, %v586, %v523
    %vm591 = vcmp.lt.s32.totalorder %v588, %v525
    %v592 = vsel %vm591, %v588, %v525
    %vm593 = vcmp.lt.s32.totalorder %v590, %v527
    %v594 = vsel %vm593, %v590, %v527
    %vm595 = vcmp.lt.s32.totalorder %v592, %v529
    %v596 = vsel %vm595, %v592, %v529
    %vm597 = vcmp.lt.s32.totalorder %v594, %v531
    %v598 = vsel %vm597, %v594, %v531
    %vm599 = vcmp.lt.s32.totalorder %v596, %v533
    %v600 = vsel %vm599, %v596, %v533
    %vm601 = vcmp.lt.s32.totalorder %v598, %v535
    %v602 = vsel %vm601, %v598, %v535
    %vm603 = vcmp.lt.s32.totalorder %v600, %v537
    %v604 = vsel %vm603, %v600, %v537
    %vm605 = vcmp.lt.s32.totalorder %v602, %v539
    %v606 = vsel %vm605, %v602, %v539
    %vm607 = vcmp.lt.s32.totalorder %v604, %v541
    %v608 = vsel %vm607, %v604, %v541
    %vm609 = vcmp.lt.s32.totalorder %v606, %v608
    %v610 = vsel %vm609, %v606, %v608
    %v611 = vrot.slane %v610, 4
    %vm612 = vcmp.lt.s32.totalorder %v610, %v611
    %v613 = vsel %vm612, %v610, %v611
    %v614 = vrot.slane %v613, 2
    %vm615 = vcmp.lt.s32.totalorder %v613, %v614
    %v616 = vsel %vm615, %v613, %v614
    %v617 = vrot.slane %v616, 1
    %vm618 = vcmp.lt.s32.totalorder %v616, %v617
    %v619 = vsel %vm618, %v616, %v617
    %vm620 = vcmp.eq.s32.totalorder %v462, %v580
    %vm621 = vcmp.eq.s32.totalorder %v462, %v619
    %vm622 = vcmp.eq.s32.totalorder %v463, %v580
    %vm623 = vcmp.eq.s32.totalorder %v463, %v619
    %vm624 = vcmp.eq.s32.totalorder %v464, %v580
    %vm625 = vcmp.eq.s32.totalorder %v464, %v619
    %vm626 = vcmp.eq.s32.totalorder %v465, %v580
    %vm627 = vcmp.eq.s32.totalorder %v465, %v619
    %vm628 = vcmp.eq.s32.totalorder %v466, %v580
    %vm629 = vcmp.eq.s32.totalorder %v466, %v619
    %vm630 = vcmp.eq.s32.totalorder %v467, %v580
    %vm631 = vcmp.eq.s32.totalorder %v467, %v619
    %vm632 = vcmp.eq.s32.totalorder %v468, %v580
    %vm633 = vcmp.eq.s32.totalorder %v468, %v619
    %vm634 = vcmp.eq.s32.totalorder %v469, %v580
    %vm635 = vcmp.eq.s32.totalorder %v469, %v619
    %vm636 = vcmp.eq.s32.totalorder %v470, %v580
    %vm637 = vcmp.eq.s32.totalorder %v470, %v619
    %vm638 = vcmp.eq.s32.totalorder %v471, %v580
    %vm639 = vcmp.eq.s32.totalorder %v471, %v619
    %vm640 = vcmp.eq.s32.totalorder %v472, %v580
    %vm641 = vcmp.eq.s32.totalorder %v472, %v619
    %vm642 = vcmp.eq.s32.totalorder %v473, %v580
    %vm643 = vcmp.eq.s32.totalorder %v473, %v619
    %vm644 = vcmp.eq.s32.totalorder %v474, %v580
    %vm645 = vcmp.eq.s32.totalorder %v474, %v619
    %vm646 = vcmp.eq.s32.totalorder %v475, %v580
    %vm647 = vcmp.eq.s32.totalorder %v475, %v619
    %vm648 = vcmp.eq.s32.totalorder %v476, %v580
    %vm649 = vcmp.eq.s32.totalorder %v476, %v619
    %vm650 = vcmp.eq.s32.totalorder %v477, %v580
    %vm651 = vcmp.eq.s32.totalorder %v477, %v619
    %v652 = vsel %vm620, 1, 0
    %v653 = vsel %vm621, 1, 0
    %v654 = vsel %vm622, 1, 0
    %v655 = vsel %vm623, 1, 0
    %v656 = vsel %vm624, 1, 0
    %v657 = vsel %vm625, 1, 0
    %v658 = vsel %vm626, 1, 0
    %v659 = vsel %vm627, 1, 0
    %v660 = vsel %vm628, 1, 0
    %v661 = vsel %vm629, 1, 0
    %v662 = vsel %vm630, 1, 0
    %v663 = vsel %vm631, 1, 0
    %v664 = vsel %vm632, 1, 0
    %v665 = vsel %vm633, 1, 0
    %v666 = vsel %vm634, 1, 0
    %v667 = vsel %vm635, 1, 0
    %v668 = vsel %vm636, 1, 0
    %v669 = vsel %vm637, 1, 0
    %v670 = vsel %vm638, 1, 0
    %v671 = vsel %vm639, 1, 0
    %v672 = vsel %vm640, 1, 0
    %v673 = vsel %vm641, 1, 0
    %v674 = vsel %vm642, 1, 0
    %v675 = vsel %vm643, 1, 0
    %v676 = vsel %vm644, 1, 0
    %v677 = vsel %vm645, 1, 0
    %v678 = vsel %vm646, 1, 0
    %v679 = vsel %vm647, 1, 0
    %v680 = vsel %vm648, 1, 0
    %v681 = vsel %vm649, 1, 0
    %v682 = vsel %vm650, 1, 0
    %v683 = vsel %vm651, 1, 0
    %v684 = vcvt.s32.f32 %v652
    %v685 = vcvt.s32.f32 %v653
    %v686 = vcvt.s32.f32 %v654
    %v687 = vcvt.s32.f32 %v655
    %v688 = vcvt.s32.f32 %v656
    %v689 = vcvt.s32.f32 %v657
    %v690 = vcvt.s32.f32 %v658
    %v691 = vcvt.s32.f32 %v659
    %v692 = vcvt.s32.f32 %v660
    %v693 = vcvt.s32.f32 %v661
    %v694 = vcvt.s32.f32 %v662
    %v695 = vcvt.s32.f32 %v663
    %v696 = vcvt.s32.f32 %v664
    %v697 = vcvt.s32.f32 %v665
    %v698 = vcvt.s32.f32 %v666
    %v699 = vcvt.s32.f32 %v667
    %v700 = vcvt.s32.f32 %v668
    %v701 = vcvt.s32.f32 %v669
    %v702 = vcvt.s32.f32 %v670
    %v703 = vcvt.s32.f32 %v671
    %v704 = vcvt.s32.f32 %v672
    %v705 = vcvt.s32.f32 %v673
    %v706 = vcvt.s32.f32 %v674
    %v707 = vcvt.s32.f32 %v675
    %v708 = vcvt.s32.f32 %v676
    %v709 = vcvt.s32.f32 %v677
    %v710 = vcvt.s32.f32 %v678
    %v711 = vcvt.s32.f32 %v679
    %v712 = vcvt.s32.f32 %v680
    %v713 = vcvt.s32.f32 %v681
    %v714 = vcvt.s32.f32 %v682
    %v715 = vcvt.s32.f32 %v683
    %716 = vmatprep.subr.mxu0 %v685
    %717 = vmatpush1.msra.mxu0 %v684
    %718 = vmatprep.subr.mxu0 %v687
    %719 = vmatpush1.msra.mxu0 %v686
    %720 = vmatprep.subr.mxu0 %v689
    %721 = vmatpush1.msra.mxu0 %v688
    %722 = vmatprep.subr.mxu0 %v691
    %723 = vmatpush1.msra.mxu0 %v690
    %724 = vmatprep.subr.mxu0 %v693
    %725 = vmatpush1.msra.mxu0 %v692
    %726 = vmatprep.subr.mxu0 %v695
    %727 = vmatpush1.msra.mxu0 %v694
    %728 = vmatprep.subr.mxu0 %v697
    %729 = vmatpush1.msra.mxu0 %v696
    %730 = vmatprep.subr.mxu0 %v699
    %731 = vmatpush1.msra.mxu0 %v698
    %732 = vmatprep.subr.mxu0 %v701
    %733 = vmatpush1.msra.mxu0 %v700
    %734 = vmatprep.subr.mxu0 %v703
    %735 = vmatpush1.msra.mxu0 %v702
    %736 = vmatprep.subr.mxu0 %v705
    %737 = vmatpush1.msra.mxu0 %v704
    %738 = vmatprep.subr.mxu0 %v707
    %739 = vmatpush1.msra.mxu0 %v706
    %740 = vmatprep.subr.mxu0 %v709
    %741 = vmatpush1.msra.mxu0 %v708
    %742 = vmatprep.subr.mxu0 %v711
    %743 = vmatpush1.msra.mxu0 %v710
    %744 = vmatprep.subr.mxu0 %v713
    %745 = vmatpush1.msra.mxu0 %v712
    %746 = vmatprep.subr.mxu0 %v715
    %747 = vmatpush1.msra.mxu0 %v714
    %748 = vmatprep.subr.mxu0 0.0
    %749 = vmatpush1.msra.mxu0 0.0
    %750 = vmatprep.subr.mxu0 0.0
    %751 = vmatpush1.msra.mxu0 0.0
    %752 = vmatprep.subr.mxu0 0.0
    %753 = vmatpush1.msra.mxu0 0.0
    %754 = vmatprep.subr.mxu0 0.0
    %755 = vmatpush1.msra.mxu0 0.0
    %756 = vmatprep.subr.mxu0 0.0
    %757 = vmatpush1.msra.mxu0 0.0
    %758 = vmatprep.subr.mxu0 0.0
    %759 = vmatpush1.msra.mxu0 0.0
    %760 = vmatprep.subr.mxu0 0.0
    %761 = vmatpush1.msra.mxu0 0.0
    %762 = vmatprep.subr.mxu0 0.0
    %763 = vmatpush1.msra.mxu0 0.0
    %764 = vmatprep.subr.mxu0 0.0
    %765 = vmatpush1.msra.mxu0 0.0
    %766 = vmatprep.subr.mxu0 0.0
    %767 = vmatpush1.msra.mxu0 0.0
    %768 = vmatprep.subr.mxu0 0.0
    %769 = vmatpush1.msra.mxu0 0.0
    %770 = vmatprep.subr.mxu0 0.0
    %771 = vmatpush1.msra.mxu0 0.0
    %772 = vmatprep.subr.mxu0 0.0
    %773 = vmatpush1.msra.mxu0 0.0
    %774 = vmatprep.subr.mxu0 0.0
    %775 = vmatpush1.msra.mxu0 0.0
    %776 = vmatprep.subr.mxu0 0.0
    %777 = vmatpush1.msra.mxu0 0.0
    %778 = vmatprep.subr.mxu0 0.0
    %779 = vmatpush1.msra.mxu0 0.0
    %780 = vmatprep.mubr.f32.mxu0 0.0
    %781 = vmatmul.mubr.f32.gmra.mrb[0].mxu0 %v37
    %v782 = vpop.f32.mrb[0].mxu0
    %v783 = vadd.f32 0.0, %v782
    %v784 = vpop.f32.mrb[0].mxu0
    %v785 = vadd.f32 0.0, %v784
    %786 = vmatprep.mubr.f32.mxu0 0.0
    %787 = vmatmul.mubr.f32.gmra.mrb[0].mxu0 %v38
    %v788 = vpop.f32.mrb[0].mxu0
    %v789 = vadd.f32 0.0, %v788
    %v790 = vpop.f32.mrb[0].mxu0
    %v791 = vadd.f32 0.0, %v790
    %792 = vmatprep.mubr.f32.mxu0 0.0
    %793 = vmatmul.mubr.f32.gmra.mrb[0].mxu0 %v39
    %v794 = vpop.f32.mrb[0].mxu0
    %v795 = vadd.f32 0.0, %v794
    %v796 = vpop.f32.mrb[0].mxu0
    %v797 = vadd.f32 0.0, %v796
    %798 = vmatprep.mubr.f32.mxu0 0.0
    %799 = vmatmul.mubr.f32.gmra.mrb[0].mxu0 %v40
    %v800 = vpop.f32.mrb[0].mxu0
    %v801 = vadd.f32 0.0, %v800
    %v802 = vpop.f32.mrb[0].mxu0
    %v803 = vadd.f32 0.0, %v802
    %804 = vdwg.mxu0
    %v805 = vsub.f32 %v783, %v57
    %v806 = vsub.f32 %v785, %v58
    %v807 = vsub.f32 %v789, %v59
    %v808 = vsub.f32 %v791, %v60
    %v809 = vsub.f32 %v795, %v61
    %v810 = vsub.f32 %v797, %v62
    %v811 = vsub.f32 %v801, %v63
    %v812 = vsub.f32 %v803, %v64
    %v813 = vmul.f32 %v805, %v805
    %v814 = vmul.f32 %v806, %v806
    %v815 = vmul.f32 %v807, %v807
    %v816 = vmul.f32 %v808, %v808
    %v817 = vmul.f32 %v809, %v809
    %v818 = vmul.f32 %v810, %v810
    %v819 = vmul.f32 %v811, %v811
    %v820 = vmul.f32 %v812, %v812
    %v821 = vadd.f32 %v813, %v815
    %v822 = vadd.f32 %v821, %v817
    %v823 = vadd.f32 %v822, %v819
    %v824 = vrot.slane %v823, 4
    %v825 = vadd.f32 %v823, %v824
    %v826 = vrot.slane %v825, 2
    %v827 = vadd.f32 %v825, %v826
    %v828 = vrot.slane %v827, 1
    %v829 = vadd.f32 %v827, %v828
    %v830 = vadd.f32 %v814, %v816
    %v831 = vadd.f32 %v830, %v818
    %v832 = vadd.f32 %v831, %v820
    %v833 = vrot.slane %v832, 4
    %v834 = vadd.f32 %v832, %v833
    %v835 = vrot.slane %v834, 2
    %v836 = vadd.f32 %v834, %v835
    %v837 = vrot.slane %v836, 1
    %v838 = vadd.f32 %v836, %v837
    %839 = vst [vmem:[%s4] sm:$0xff] %v783
    %840 = vst [vmem:[%s4 + $0x8] sm:$0xff] %v785
    %841 = vst [vmem:[%s4 + $0x10] sm:$0xff] %v789
    %842 = vst [vmem:[%s4 + $0x18] sm:$0xff] %v791
    %843 = vst [vmem:[%s4 + $0x20] sm:$0xff] %v795
    %844 = vst [vmem:[%s4 + $0x28] sm:$0xff] %v797
    %845 = vst [vmem:[%s4 + $0x30] sm:$0xff] %v801
    %846 = vst [vmem:[%s4 + $0x38] sm:$0xff] %v803
    %v847 = vcombine.low %v580, %v619
    %v849 = vunpack.c.l.s4 1966171168
    %v850 = vunpack.c.0.s8 %v849
    %v851 = vlaneseq
    %v852 = vshrl.u32 %v851, 7
    %v853 = vsub.s32 %v850, %v852
    %v854 = vrot.slane %v847, %v853
    %v856 = vunpack.c.l.s4 1966171168
    %v857 = vunpack.c.0.s8 %v856
    %v858 = vlaneseq
    %v859 = vshrl.u32 %v858, 7
    %v860 = vsub.s32 %v857, %v859
    %v861 = vrot.slane %v854, %v860
    %v862 = vlaneseq
    %vm863 = vcmp.ge.s32.totalorder %v862, 0
    %vm864 = vcmp.lt.s32.totalorder %v862, 256
    %vm865 = vmand %vm863, %vm864
    %866 = vst.msk [vmem:[#allocation2] sm:$0x3] %vm865, %v861
    %s867 = scalar_lea.vmem %s0, 64
    %v868 = vld [vmem:[%s867] sm:$0xff]
    %v869 = vld [vmem:[%s867 + $0x8] sm:$0xff]
    %v870 = vld [vmem:[%s867 + $0x10] sm:$0xff]
    %v871 = vld [vmem:[%s867 + $0x18] sm:$0xff]
    %v872 = vld [vmem:[%s867 + $0x20] sm:$0xff]
    %v873 = vld [vmem:[%s867 + $0x28] sm:$0xff]
    %v874 = vld [vmem:[%s867 + $0x30] sm:$0xff]
    %v875 = vld [vmem:[%s867 + $0x38] sm:$0xff]
    %876 = vmatprep.subr.mxu0 %v869
    %877 = vmatpush1.msra.mxu0 %v868
    %878 = vmatprep.subr.mxu0 %v871
    %879 = vmatpush1.msra.mxu0 %v870
    %880 = vmatprep.subr.mxu0 %v873
    %881 = vmatpush1.msra.mxu0 %v872
    %882 = vmatprep.subr.mxu0 %v875
    %883 = vmatpush1.msra.mxu0 %v874
    %884 = vmatprep.subr.mxu0 0.0
    %885 = vmatpush1.msra.mxu0 0.0
    %886 = vmatprep.subr.mxu0 0.0
    %887 = vmatpush1.msra.mxu0 0.0
    %888 = vmatprep.subr.mxu0 0.0
    %889 = vmatpush1.msra.mxu0 0.0
    %890 = vmatprep.subr.mxu0 0.0
    %891 = vmatpush1.msra.mxu0 0.0
    %892 = vmatprep.subr.mxu0 0.0
    %893 = vmatpush1.msra.mxu0 0.0
    %894 = vmatprep.subr.mxu0 0.0
    %895 = vmatpush1.msra.mxu0 0.0
    %896 = vmatprep.subr.mxu0 0.0
    %897 = vmatpush1.msra.mxu0 0.0
    %898 = vmatprep.subr.mxu0 0.0
    %899 = vmatpush1.msra.mxu0 0.0
    %900 = vmatprep.subr.mxu0 0.0
    %901 = vmatpush1.msra.mxu0 0.0
    %902 = vmatprep.subr.mxu0 0.0
    %903 = vmatpush1.msra.mxu0 0.0
    %904 = vmatprep.subr.mxu0 0.0
    %905 = vmatpush1.msra.mxu0 0.0
    %906 = vmatprep.subr.mxu0 0.0
    %907 = vmatpush1.msra.mxu0 0.0
    %908 = vmatprep.subr.mxu0 0.0
    %909 = vmatpush1.msra.mxu0 0.0
    %910 = vmatprep.subr.mxu0 0.0
    %911 = vmatpush1.msra.mxu0 0.0
    %912 = vmatprep.subr.mxu0 0.0
    %913 = vmatpush1.msra.mxu0 0.0
    %914 = vmatprep.subr.mxu0 0.0
    %915 = vmatpush1.msra.mxu0 0.0
    %916 = vmatprep.subr.mxu0 0.0
    %917 = vmatpush1.msra.mxu0 0.0
    %918 = vmatprep.subr.mxu0 0.0
    %919 = vmatpush1.msra.mxu0 0.0
    %920 = vmatprep.subr.mxu0 0.0
    %921 = vmatpush1.msra.mxu0 0.0
    %922 = vmatprep.subr.mxu0 0.0
    %923 = vmatpush1.msra.mxu0 0.0
    %924 = vmatprep.subr.mxu0 0.0
    %925 = vmatpush1.msra.mxu0 0.0
    %926 = vmatprep.subr.mxu0 0.0
    %927 = vmatpush1.msra.mxu0 0.0
    %928 = vmatprep.subr.mxu0 0.0
    %929 = vmatpush1.msra.mxu0 0.0
    %930 = vmatprep.subr.mxu0 0.0
    %931 = vmatpush1.msra.mxu0 0.0
    %932 = vmatprep.subr.mxu0 0.0
    %933 = vmatpush1.msra.mxu0 0.0
    %934 = vmatprep.subr.mxu0 0.0
    %935 = vmatpush1.msra.mxu0 0.0
    %936 = vmatprep.subr.mxu0 0.0
    %937 = vmatpush1.msra.mxu0 0.0
    %938 = vmatprep.subr.mxu0 0.0
    %939 = vmatpush1.msra.mxu0 0.0
    %940 = vmatprep.mubr.f32.mxu0 0.0
    %941 = vmatmul.mubr.f32.gmra.mrb[0].mxu0 %v67
    %v942 = vpop.f32.mrb[0].mxu0
    %v943 = vadd.f32 0.0, %v942
    %v944 = vpop.f32.mrb[0].mxu0
    %v945 = vadd.f32 0.0, %v944
    %946 = vmatprep.mubr.f32.mxu0 0.0
    %947 = vmatmul.mubr.f32.gmra.mrb[0].mxu0 %v70
    %v948 = vpop.f32.mrb[0].mxu0
    %v949 = vadd.f32 0.0, %v948
    %v950 = vpop.f32.mrb[0].mxu0
    %v951 = vadd.f32 0.0, %v950
    %952 = vmatprep.mubr.f32.mxu0 0.0
    %953 = vmatmul.mubr.f32.gmra.mrb[0].mxu0 %v73
    %v954 = vpop.f32.mrb[0].mxu0
    %v955 = vadd.f32 0.0, %v954
    %v956 = vpop.f32.mrb[0].mxu0
    %v957 = vadd.f32 0.0, %v956
    %958 = vmatprep.mubr.f32.mxu0 0.0
    %959 = vmatmul.mubr.f32.gmra.mrb[0].mxu0 %v76
    %v960 = vpop.f32.mrb[0].mxu0
    %v961 = vadd.f32 0.0, %v960
    %v962 = vpop.f32.mrb[0].mxu0
    %v963 = vadd.f32 0.0, %v962
    %964 = vmatprep.mubr.f32.mxu0 0.0
    %965 = vmatmul.mubr.f32.gmra.mrb[0].mxu0 %v79
    %v966 = vpop.f32.mrb[0].mxu0
    %v967 = vadd.f32 0.0, %v966
    %v968 = vpop.f32.mrb[0].mxu0
    %v969 = vadd.f32 0.0, %v968
    %970 = vmatprep.mubr.f32.mxu0 0.0
    %971 = vmatmul.mubr.f32.gmra.mrb[0].mxu0 %v82
    %v972 = vpop.f32.mrb[0].mxu0
    %v973 = vadd.f32 0.0, %v972
    %v974 = vpop.f32.mrb[0].mxu0
    %v975 = vadd.f32 0.0, %v974
    %976 = vmatprep.mubr.f32.mxu0 0.0
    %977 = vmatmul.mubr.f32.gmra.mrb[0].mxu0 %v85
    %v978 = vpop.f32.mrb[0].mxu0
    %v979 = vadd.f32 0.0, %v978
    %v980 = vpop.f32.mrb[0].mxu0
    %v981 = vadd.f32 0.0, %v980
    %982 = vmatprep.mubr.f32.mxu0 0.0
    %983 = vmatmul.mubr.f32.gmra.mrb[0].mxu0 %v88
    %v984 = vpop.f32.mrb[0].mxu0
    %v985 = vadd.f32 0.0, %v984
    %v986 = vpop.f32.mrb[0].mxu0
    %v987 = vadd.f32 0.0, %v986
    %988 = vmatprep.mubr.f32.mxu0 0.0
    %989 = vmatmul.mubr.f32.gmra.mrb[0].mxu0 %v91
    %v990 = vpop.f32.mrb[0].mxu0
    %v991 = vadd.f32 0.0, %v990
    %v992 = vpop.f32.mrb[0].mxu0
    %v993 = vadd.f32 0.0, %v992
    %994 = vmatprep.mubr.f32.mxu0 0.0
    %995 = vmatmul.mubr.f32.gmra.mrb[0].mxu0 %v94
    %v996 = vpop.f32.mrb[0].mxu0
    %v997 = vadd.f32 0.0, %v996
    %v998 = vpop.f32.mrb[0].mxu0
    %v999 = vadd.f32 0.0, %v998
    %1000 = vmatprep.mubr.f32.mxu0 0.0
    %1001 = vmatmul.mubr.f32.gmra.mrb[0].mxu0 %v97
    %v1002 = vpop.f32.mrb[0].mxu0
    %v1003 = vadd.f32 0.0, %v1002
    %v1004 = vpop.f32.mrb[0].mxu0
    %v1005 = vadd.f32 0.0, %v1004
    %1006 = vmatprep.mubr.f32.mxu0 0.0
    %1007 = vmatmul.mubr.f32.gmra.mrb[0].mxu0 %v100
    %v1008 = vpop.f32.mrb[0].mxu0
    %v1009 = vadd.f32 0.0, %v1008
    %v1010 = vpop.f32.mrb[0].mxu0
    %v1011 = vadd.f32 0.0, %v1010
    %1012 = vmatprep.mubr.f32.mxu0 0.0
    %1013 = vmatmul.mubr.f32.gmra.mrb[0].mxu0 %v103
    %v1014 = vpop.f32.mrb[0].mxu0
    %v1015 = vadd.f32 0.0, %v1014
    %v1016 = vpop.f32.mrb[0].mxu0
    %v1017 = vadd.f32 0.0, %v1016
    %1018 = vmatprep.mubr.f32.mxu0 0.0
    %1019 = vmatmul.mubr.f32.gmra.mrb[0].mxu0 %v106
    %v1020 = vpop.f32.mrb[0].mxu0
    %v1021 = vadd.f32 0.0, %v1020
    %v1022 = vpop.f32.mrb[0].mxu0
    %v1023 = vadd.f32 0.0, %v1022
    %1024 = vmatprep.mubr.f32.mxu0 0.0
    %1025 = vmatmul.mubr.f32.gmra.mrb[0].mxu0 %v109
    %v1026 = vpop.f32.mrb[0].mxu0
    %v1027 = vadd.f32 0.0, %v1026
    %v1028 = vpop.f32.mrb[0].mxu0
    %v1029 = vadd.f32 0.0, %v1028
    %1030 = vmatprep.mubr.f32.mxu0 0.0
    %1031 = vmatmul.mubr.f32.gmra.mrb[0].mxu0 %v112
    %v1032 = vpop.f32.mrb[0].mxu0
    %v1033 = vadd.f32 0.0, %v1032
    %v1034 = vpop.f32.mrb[0].mxu0
    %v1035 = vadd.f32 0.0, %v1034
    %1036 = vdwg.mxu0
    %v1037 = vmul.f32 %v943, 2.0
    %v1038 = vmul.f32 %v945, 2.0
    %v1039 = vmul.f32 %v949, 2.0
    %v1040 = vmul.f32 %v951, 2.0
    %v1041 = vmul.f32 %v955, 2.0
    %v1042 = vmul.f32 %v957, 2.0
    %v1043 = vmul.f32 %v961, 2.0
    %v1044 = vmul.f32 %v963, 2.0
    %v1045 = vmul.f32 %v967, 2.0
    %v1046 = vmul.f32 %v969, 2.0
    %v1047 = vmul.f32 %v973, 2.0
    %v1048 = vmul.f32 %v975, 2.0
    %v1049 = vmul.f32 %v979, 2.0
    %v1050 = vmul.f32 %v981, 2.0
    %v1051 = vmul.f32 %v985, 2.0
    %v1052 = vmul.f32 %v987, 2.0
    %v1053 = vmul.f32 %v991, 2.0
    %v1054 = vmul.f32 %v993, 2.0
    %v1055 = vmul.f32 %v997, 2.0
    %v1056 = vmul.f32 %v999, 2.0
    %v1057 = vmul.f32 %v1003, 2.0
    %v1058 = vmul.f32 %v1005, 2.0
    %v1059 = vmul.f32 %v1009, 2.0
    %v1060 = vmul.f32 %v1011, 2.0
    %v1061 = vmul.f32 %v1015, 2.0
    %v1062 = vmul.f32 %v1017, 2.0
    %v1063 = vmul.f32 %v1021, 2.0
    %v1064 = vmul.f32 %v1023, 2.0
    %v1065 = vmul.f32 %v1027, 2.0
    %v1066 = vmul.f32 %v1029, 2.0
    %v1067 = vmul.f32 %v1033, 2.0
    %v1068 = vmul.f32 %v1035, 2.0
    %v1069 = vsub.f32 %v310, %v1037
    %v1070 = vsub.f32 %v310, %v1038
    %v1071 = vsub.f32 %v315, %v1039
    %v1072 = vsub.f32 %v315, %v1040
    %v1073 = vsub.f32 %v320, %v1041
    %v1074 = vsub.f32 %v320, %v1042
    %v1075 = vsub.f32 %v325, %v1043
    %v1076 = vsub.f32 %v325, %v1044
    %v1077 = vsub.f32 %v330, %v1045
    %v1078 = vsub.f32 %v330, %v1046
    %v1079 = vsub.f32 %v335, %v1047
    %v1080 = vsub.f32 %v335, %v1048
    %v1081 = vsub.f32 %v340, %v1049
    %v1082 = vsub.f32 %v340, %v1050
    %v1083 = vsub.f32 %v345, %v1051
    %v1084 = vsub.f32 %v345, %v1052
    %v1085 = vsub.f32 %v350, %v1053
    %v1086 = vsub.f32 %v350, %v1054
    %v1087 = vsub.f32 %v355, %v1055
    %v1088 = vsub.f32 %v355, %v1056
    %v1089 = vsub.f32 %v360, %v1057
    %v1090 = vsub.f32 %v360, %v1058
    %v1091 = vsub.f32 %v365, %v1059
    %v1092 = vsub.f32 %v365, %v1060
    %v1093 = vsub.f32 %v370, %v1061
    %v1094 = vsub.f32 %v370, %v1062
    %v1095 = vsub.f32 %v375, %v1063
    %v1096 = vsub.f32 %v375, %v1064
    %v1097 = vsub.f32 %v380, %v1065
    %v1098 = vsub.f32 %v380, %v1066
    %v1099 = vsub.f32 %v385, %v1067
    %v1100 = vsub.f32 %v385, %v1068
    %v1101 = vmin.f32 %v1069, %v1073
    %v1102 = vmin.f32 %v1071, %v1075
    %v1103 = vmin.f32 %v1101, %v1077
    %v1104 = vmin.f32 %v1102, %v1079
    %v1105 = vmin.f32 %v1103, %v1081
    %v1106 = vmin.f32 %v1104, %v1083
    %v1107 = vmin.f32 %v1105, %v1085
    %v1108 = vmin.f32 %v1106, %v1087
    %v1109 = vmin.f32 %v1107, %v1089
    %v1110 = vmin.f32 %v1108, %v1091
    %v1111 = vmin.f32 %v1109, %v1093
    %v1112 = vmin.f32 %v1110, %v1095
    %v1113 = vmin.f32 %v1111, %v1097
    %v1114 = vmin.f32 %v1112, %v1099
    %v1115 = vmin.f32 %v1113, %v1114
    %v1116 = vrot.slane %v1115, 4
    %v1117 = vmin.f32 %v1115, %v1116
    %v1118 = vrot.slane %v1117, 2
    %v1119 = vmin.f32 %v1117, %v1118
    %v1120 = vrot.slane %v1119, 1
    %v1121 = vmin.f32 %v1119, %v1120
    %v1122 = vmin.f32 %v1070, %v1074
    %v1123 = vmin.f32 %v1072, %v1076
    %v1124 = vmin.f32 %v1122, %v1078
    %v1125 = vmin.f32 %v1123, %v1080
    %v1126 = vmin.f32 %v1124, %v1082
    %v1127 = vmin.f32 %v1125, %v1084
    %v1128 = vmin.f32 %v1126, %v1086
    %v1129 = vmin.f32 %v1127, %v1088
    %v1130 = vmin.f32 %v1128, %v1090
    %v1131 = vmin.f32 %v1129, %v1092
    %v1132 = vmin.f32 %v1130, %v1094
    %v1133 = vmin.f32 %v1131, %v1096
    %v1134 = vmin.f32 %v1132, %v1098
    %v1135 = vmin.f32 %v1133, %v1100
    %v1136 = vmin.f32 %v1134, %v1135
    %v1137 = vrot.slane %v1136, 4
    %v1138 = vmin.f32 %v1136, %v1137
    %v1139 = vrot.slane %v1138, 2
    %v1140 = vmin.f32 %v1138, %v1139
    %v1141 = vrot.slane %v1140, 1
    %v1142 = vmin.f32 %v1140, %v1141
    %vm1143 = vcmp.le.f32.partialorder %v1069, %v1121
    %vm1144 = vcmp.le.f32.partialorder %v1070, %v1142
    %vm1145 = vcmp.le.f32.partialorder %v1071, %v1121
    %vm1146 = vcmp.le.f32.partialorder %v1072, %v1142
    %vm1147 = vcmp.le.f32.partialorder %v1073, %v1121
    %vm1148 = vcmp.le.f32.partialorder %v1074, %v1142
    %vm1149 = vcmp.le.f32.partialorder %v1075, %v1121
    %vm1150 = vcmp.le.f32.partialorder %v1076, %v1142
    %vm1151 = vcmp.le.f32.partialorder %v1077, %v1121
    %vm1152 = vcmp.le.f32.partialorder %v1078, %v1142
    %vm1153 = vcmp.le.f32.partialorder %v1079, %v1121
    %vm1154 = vcmp.le.f32.partialorder %v1080, %v1142
    %vm1155 = vcmp.le.f32.partialorder %v1081, %v1121
    %vm1156 = vcmp.le.f32.partialorder %v1082, %v1142
    %vm1157 = vcmp.le.f32.partialorder %v1083, %v1121
    %vm1158 = vcmp.le.f32.partialorder %v1084, %v1142
    %vm1159 = vcmp.le.f32.partialorder %v1085, %v1121
    %vm1160 = vcmp.le.f32.partialorder %v1086, %v1142
    %vm1161 = vcmp.le.f32.partialorder %v1087, %v1121
    %vm1162 = vcmp.le.f32.partialorder %v1088, %v1142
    %vm1163 = vcmp.le.f32.partialorder %v1089, %v1121
    %vm1164 = vcmp.le.f32.partialorder %v1090, %v1142
    %vm1165 = vcmp.le.f32.partialorder %v1091, %v1121
    %vm1166 = vcmp.le.f32.partialorder %v1092, %v1142
    %vm1167 = vcmp.le.f32.partialorder %v1093, %v1121
    %vm1168 = vcmp.le.f32.partialorder %v1094, %v1142
    %vm1169 = vcmp.le.f32.partialorder %v1095, %v1121
    %vm1170 = vcmp.le.f32.partialorder %v1096, %v1142
    %vm1171 = vcmp.le.f32.partialorder %v1097, %v1121
    %vm1172 = vcmp.le.f32.partialorder %v1098, %v1142
    %vm1173 = vcmp.le.f32.partialorder %v1099, %v1121
    %vm1174 = vcmp.le.f32.partialorder %v1100, %v1142
    %v1175 = vsel %vm1143, %v462, 128
    %v1176 = vsel %vm1144, %v462, 128
    %v1177 = vsel %vm1145, %v463, 128
    %v1178 = vsel %vm1146, %v463, 128
    %v1179 = vsel %vm1147, %v464, 128
    %v1180 = vsel %vm1148, %v464, 128
    %v1181 = vsel %vm1149, %v465, 128
    %v1182 = vsel %vm1150, %v465, 128
    %v1183 = vsel %vm1151, %v466, 128
    %v1184 = vsel %vm1152, %v466, 128
    %v1185 = vsel %vm1153, %v467, 128
    %v1186 = vsel %vm1154, %v467, 128
    %v1187 = vsel %vm1155, %v468, 128
    %v1188 = vsel %vm1156, %v468, 128
    %v1189 = vsel %vm1157, %v469, 128
    %v1190 = vsel %vm1158, %v469, 128
    %v1191 = vsel %vm1159, %v470, 128
    %v1192 = vsel %vm1160, %v470, 128
    %v1193 = vsel %vm1161, %v471, 128
    %v1194 = vsel %vm1162, %v471, 128
    %v1195 = vsel %vm1163, %v472, 128
    %v1196 = vsel %vm1164, %v472, 128
    %v1197 = vsel %vm1165, %v473, 128
    %v1198 = vsel %vm1166, %v473, 128
    %v1199 = vsel %vm1167, %v474, 128
    %v1200 = vsel %vm1168, %v474, 128
    %v1201 = vsel %vm1169, %v475, 128
    %v1202 = vsel %vm1170, %v475, 128
    %v1203 = vsel %vm1171, %v476, 128
    %v1204 = vsel %vm1172, %v476, 128
    %v1205 = vsel %vm1173, %v477, 128
    %v1206 = vsel %vm1174, %v477, 128
    %vm1207 = vcmp.lt.s32.totalorder %v1175, %v1179
    %v1208 = vsel %vm1207, %v1175, %v1179
    %vm1209 = vcmp.lt.s32.totalorder %v1177, %v1181
    %v1210 = vsel %vm1209, %v1177, %v1181
    %vm1211 = vcmp.lt.s32.totalorder %v1208, %v1183
    %v1212 = vsel %vm1211, %v1208, %v1183
    %vm1213 = vcmp.lt.s32.totalorder %v1210, %v1185
    %v1214 = vsel %vm1213, %v1210, %v1185
    %vm1215 = vcmp.lt.s32.totalorder %v1212, %v1187
    %v1216 = vsel %vm1215, %v1212, %v1187
    %vm1217 = vcmp.lt.s32.totalorder %v1214, %v1189
    %v1218 = vsel %vm1217, %v1214, %v1189
    %vm1219 = vcmp.lt.s32.totalorder %v1216, %v1191
    %v1220 = vsel %vm1219, %v1216, %v1191
    %vm1221 = vcmp.lt.s32.totalorder %v1218, %v1193
    %v1222 = vsel %vm1221, %v1218, %v1193
    %vm1223 = vcmp.lt.s32.totalorder %v1220, %v1195
    %v1224 = vsel %vm1223, %v1220, %v1195
    %vm1225 = vcmp.lt.s32.totalorder %v1222, %v1197
    %v1226 = vsel %vm1225, %v1222, %v1197
    %vm1227 = vcmp.lt.s32.totalorder %v1224, %v1199
    %v1228 = vsel %vm1227, %v1224, %v1199
    %vm1229 = vcmp.lt.s32.totalorder %v1226, %v1201
    %v1230 = vsel %vm1229, %v1226, %v1201
    %vm1231 = vcmp.lt.s32.totalorder %v1228, %v1203
    %v1232 = vsel %vm1231, %v1228, %v1203
    %vm1233 = vcmp.lt.s32.totalorder %v1230, %v1205
    %v1234 = vsel %vm1233, %v1230, %v1205
    %vm1235 = vcmp.lt.s32.totalorder %v1232, %v1234
    %v1236 = vsel %vm1235, %v1232, %v1234
    %v1237 = vrot.slane %v1236, 4
    %vm1238 = vcmp.lt.s32.totalorder %v1236, %v1237
    %v1239 = vsel %vm1238, %v1236, %v1237
    %v1240 = vrot.slane %v1239, 2
    %vm1241 = vcmp.lt.s32.totalorder %v1239, %v1240
    %v1242 = vsel %vm1241, %v1239, %v1240
    %v1243 = vrot.slane %v1242, 1
    %vm1244 = vcmp.lt.s32.totalorder %v1242, %v1243
    %v1245 = vsel %vm1244, %v1242, %v1243
    %vm1246 = vcmp.lt.s32.totalorder %v1176, %v1180
    %v1247 = vsel %vm1246, %v1176, %v1180
    %vm1248 = vcmp.lt.s32.totalorder %v1178, %v1182
    %v1249 = vsel %vm1248, %v1178, %v1182
    %vm1250 = vcmp.lt.s32.totalorder %v1247, %v1184
    %v1251 = vsel %vm1250, %v1247, %v1184
    %vm1252 = vcmp.lt.s32.totalorder %v1249, %v1186
    %v1253 = vsel %vm1252, %v1249, %v1186
    %vm1254 = vcmp.lt.s32.totalorder %v1251, %v1188
    %v1255 = vsel %vm1254, %v1251, %v1188
    %vm1256 = vcmp.lt.s32.totalorder %v1253, %v1190
    %v1257 = vsel %vm1256, %v1253, %v1190
    %vm1258 = vcmp.lt.s32.totalorder %v1255, %v1192
    %v1259 = vsel %vm1258, %v1255, %v1192
    %vm1260 = vcmp.lt.s32.totalorder %v1257, %v1194
    %v1261 = vsel %vm1260, %v1257, %v1194
    %vm1262 = vcmp.lt.s32.totalorder %v1259, %v1196
    %v1263 = vsel %vm1262, %v1259, %v1196
    %vm1264 = vcmp.lt.s32.totalorder %v1261, %v1198
    %v1265 = vsel %vm1264, %v1261, %v1198
    %vm1266 = vcmp.lt.s32.totalorder %v1263, %v1200
    %v1267 = vsel %vm1266, %v1263, %v1200
    %vm1268 = vcmp.lt.s32.totalorder %v1265, %v1202
    %v1269 = vsel %vm1268, %v1265, %v1202
    %vm1270 = vcmp.lt.s32.totalorder %v1267, %v1204
    %v1271 = vsel %vm1270, %v1267, %v1204
    %vm1272 = vcmp.lt.s32.totalorder %v1269, %v1206
    %v1273 = vsel %vm1272, %v1269, %v1206
    %vm1274 = vcmp.lt.s32.totalorder %v1271, %v1273
    %v1275 = vsel %vm1274, %v1271, %v1273
    %v1276 = vrot.slane %v1275, 4
    %vm1277 = vcmp.lt.s32.totalorder %v1275, %v1276
    %v1278 = vsel %vm1277, %v1275, %v1276
    %v1279 = vrot.slane %v1278, 2
    %vm1280 = vcmp.lt.s32.totalorder %v1278, %v1279
    %v1281 = vsel %vm1280, %v1278, %v1279
    %v1282 = vrot.slane %v1281, 1
    %vm1283 = vcmp.lt.s32.totalorder %v1281, %v1282
    %v1284 = vsel %vm1283, %v1281, %v1282
    %vm1285 = vcmp.eq.s32.totalorder %v462, %v1245
    %vm1286 = vcmp.eq.s32.totalorder %v462, %v1284
    %vm1287 = vcmp.eq.s32.totalorder %v463, %v1245
    %vm1288 = vcmp.eq.s32.totalorder %v463, %v1284
    %vm1289 = vcmp.eq.s32.totalorder %v464, %v1245
    %vm1290 = vcmp.eq.s32.totalorder %v464, %v1284
    %vm1291 = vcmp.eq.s32.totalorder %v465, %v1245
    %vm1292 = vcmp.eq.s32.totalorder %v465, %v1284
    %vm1293 = vcmp.eq.s32.totalorder %v466, %v1245
    %vm1294 = vcmp.eq.s32.totalorder %v466, %v1284
    %vm1295 = vcmp.eq.s32.totalorder %v467, %v1245
    %vm1296 = vcmp.eq.s32.totalorder %v467, %v1284
    %vm1297 = vcmp.eq.s32.totalorder %v468, %v1245
    %vm1298 = vcmp.eq.s32.totalorder %v468, %v1284
    %vm1299 = vcmp.eq.s32.totalorder %v469, %v1245
    %vm1300 = vcmp.eq.s32.totalorder %v469, %v1284
    %vm1301 = vcmp.eq.s32.totalorder %v470, %v1245
    %vm1302 = vcmp.eq.s32.totalorder %v470, %v1284
    %vm1303 = vcmp.eq.s32.totalorder %v471, %v1245
    %vm1304 = vcmp.eq.s32.totalorder %v471, %v1284
    %vm1305 = vcmp.eq.s32.totalorder %v472, %v1245
    %vm1306 = vcmp.eq.s32.totalorder %v472, %v1284
    %vm1307 = vcmp.eq.s32.totalorder %v473, %v1245
    %vm1308 = vcmp.eq.s32.totalorder %v473, %v1284
    %vm1309 = vcmp.eq.s32.totalorder %v474, %v1245
    %vm1310 = vcmp.eq.s32.totalorder %v474, %v1284
    %vm1311 = vcmp.eq.s32.totalorder %v475, %v1245
    %vm1312 = vcmp.eq.s32.totalorder %v475, %v1284
    %vm1313 = vcmp.eq.s32.totalorder %v476, %v1245
    %vm1314 = vcmp.eq.s32.totalorder %v476, %v1284
    %vm1315 = vcmp.eq.s32.totalorder %v477, %v1245
    %vm1316 = vcmp.eq.s32.totalorder %v477, %v1284
    %v1317 = vsel %vm1285, 1, 0
    %v1318 = vsel %vm1286, 1, 0
    %v1319 = vsel %vm1287, 1, 0
    %v1320 = vsel %vm1288, 1, 0
    %v1321 = vsel %vm1289, 1, 0
    %v1322 = vsel %vm1290, 1, 0
    %v1323 = vsel %vm1291, 1, 0
    %v1324 = vsel %vm1292, 1, 0
    %v1325 = vsel %vm1293, 1, 0
    %v1326 = vsel %vm1294, 1, 0
    %v1327 = vsel %vm1295, 1, 0
    %v1328 = vsel %vm1296, 1, 0
    %v1329 = vsel %vm1297, 1, 0
    %v1330 = vsel %vm1298, 1, 0
    %v1331 = vsel %vm1299, 1, 0
    %v1332 = vsel %vm1300, 1, 0
    %v1333 = vsel %vm1301, 1, 0
    %v1334 = vsel %vm1302, 1, 0
    %v1335 = vsel %vm1303, 1, 0
    %v1336 = vsel %vm1304, 1, 0
    %v1337 = vsel %vm1305, 1, 0
    %v1338 = vsel %vm1306, 1, 0
    %v1339 = vsel %vm1307, 1, 0
    %v1340 = vsel %vm1308, 1, 0
    %v1341 = vsel %vm1309, 1, 0
    %v1342 = vsel %vm1310, 1, 0
    %v1343 = vsel %vm1311, 1, 0
    %v1344 = vsel %vm1312, 1, 0
    %v1345 = vsel %vm1313, 1, 0
    %v1346 = vsel %vm1314, 1, 0
    %v1347 = vsel %vm1315, 1, 0
    %v1348 = vsel %vm1316, 1, 0
    %v1349 = vcvt.s32.f32 %v1317
    %v1350 = vcvt.s32.f32 %v1318
    %v1351 = vcvt.s32.f32 %v1319
    %v1352 = vcvt.s32.f32 %v1320
    %v1353 = vcvt.s32.f32 %v1321
    %v1354 = vcvt.s32.f32 %v1322
    %v1355 = vcvt.s32.f32 %v1323
    %v1356 = vcvt.s32.f32 %v1324
    %v1357 = vcvt.s32.f32 %v1325
    %v1358 = vcvt.s32.f32 %v1326
    %v1359 = vcvt.s32.f32 %v1327
    %v1360 = vcvt.s32.f32 %v1328
    %v1361 = vcvt.s32.f32 %v1329
    %v1362 = vcvt.s32.f32 %v1330
    %v1363 = vcvt.s32.f32 %v1331
    %v1364 = vcvt.s32.f32 %v1332
    %v1365 = vcvt.s32.f32 %v1333
    %v1366 = vcvt.s32.f32 %v1334
    %v1367 = vcvt.s32.f32 %v1335
    %v1368 = vcvt.s32.f32 %v1336
    %v1369 = vcvt.s32.f32 %v1337
    %v1370 = vcvt.s32.f32 %v1338
    %v1371 = vcvt.s32.f32 %v1339
    %v1372 = vcvt.s32.f32 %v1340
    %v1373 = vcvt.s32.f32 %v1341
    %v1374 = vcvt.s32.f32 %v1342
    %v1375 = vcvt.s32.f32 %v1343
    %v1376 = vcvt.s32.f32 %v1344
    %v1377 = vcvt.s32.f32 %v1345
    %v1378 = vcvt.s32.f32 %v1346
    %v1379 = vcvt.s32.f32 %v1347
    %v1380 = vcvt.s32.f32 %v1348
    %1381 = vmatprep.subr.mxu0 %v1350
    %1382 = vmatpush1.msra.mxu0 %v1349
    %1383 = vmatprep.subr.mxu0 %v1352
    %1384 = vmatpush1.msra.mxu0 %v1351
    %1385 = vmatprep.subr.mxu0 %v1354
    %1386 = vmatpush1.msra.mxu0 %v1353
    %1387 = vmatprep.subr.mxu0 %v1356
    %1388 = vmatpush1.msra.mxu0 %v1355
    %1389 = vmatprep.subr.mxu0 %v1358
    %1390 = vmatpush1.msra.mxu0 %v1357
    %1391 = vmatprep.subr.mxu0 %v1360
    %1392 = vmatpush1.msra.mxu0 %v1359
    %1393 = vmatprep.subr.mxu0 %v1362
    %1394 = vmatpush1.msra.mxu0 %v1361
    %1395 = vmatprep.subr.mxu0 %v1364
    %1396 = vmatpush1.msra.mxu0 %v1363
    %1397 = vmatprep.subr.mxu0 %v1366
    %1398 = vmatpush1.msra.mxu0 %v1365
    %1399 = vmatprep.subr.mxu0 %v1368
    %1400 = vmatpush1.msra.mxu0 %v1367
    %1401 = vmatprep.subr.mxu0 %v1370
    %1402 = vmatpush1.msra.mxu0 %v1369
    %1403 = vmatprep.subr.mxu0 %v1372
    %1404 = vmatpush1.msra.mxu0 %v1371
    %1405 = vmatprep.subr.mxu0 %v1374
    %1406 = vmatpush1.msra.mxu0 %v1373
    %1407 = vmatprep.subr.mxu0 %v1376
    %1408 = vmatpush1.msra.mxu0 %v1375
    %1409 = vmatprep.subr.mxu0 %v1378
    %1410 = vmatpush1.msra.mxu0 %v1377
    %1411 = vmatprep.subr.mxu0 %v1380
    %1412 = vmatpush1.msra.mxu0 %v1379
    %1413 = vmatprep.subr.mxu0 0.0
    %1414 = vmatpush1.msra.mxu0 0.0
    %1415 = vmatprep.subr.mxu0 0.0
    %1416 = vmatpush1.msra.mxu0 0.0
    %1417 = vmatprep.subr.mxu0 0.0
    %1418 = vmatpush1.msra.mxu0 0.0
    %1419 = vmatprep.subr.mxu0 0.0
    %1420 = vmatpush1.msra.mxu0 0.0
    %1421 = vmatprep.subr.mxu0 0.0
    %1422 = vmatpush1.msra.mxu0 0.0
    %1423 = vmatprep.subr.mxu0 0.0
    %1424 = vmatpush1.msra.mxu0 0.0
    %1425 = vmatprep.subr.mxu0 0.0
    %1426 = vmatpush1.msra.mxu0 0.0
    %1427 = vmatprep.subr.mxu0 0.0
    %1428 = vmatpush1.msra.mxu0 0.0
    %1429 = vmatprep.subr.mxu0 0.0
    %1430 = vmatpush1.msra.mxu0 0.0
    %1431 = vmatprep.subr.mxu0 0.0
    %1432 = vmatpush1.msra.mxu0 0.0
    %1433 = vmatprep.subr.mxu0 0.0
    %1434 = vmatpush1.msra.mxu0 0.0
    %1435 = vmatprep.subr.mxu0 0.0
    %1436 = vmatpush1.msra.mxu0 0.0
    %1437 = vmatprep.subr.mxu0 0.0
    %1438 = vmatpush1.msra.mxu0 0.0
    %1439 = vmatprep.subr.mxu0 0.0
    %1440 = vmatpush1.msra.mxu0 0.0
    %1441 = vmatprep.subr.mxu0 0.0
    %1442 = vmatpush1.msra.mxu0 0.0
    %1443 = vmatprep.subr.mxu0 0.0
    %1444 = vmatpush1.msra.mxu0 0.0
    %1445 = vmatprep.mubr.f32.mxu0 0.0
    %1446 = vmatmul.mubr.f32.gmra.mrb[0].mxu0 %v37
    %v1447 = vpop.f32.mrb[0].mxu0
    %v1448 = vadd.f32 0.0, %v1447
    %v1449 = vpop.f32.mrb[0].mxu0
    %v1450 = vadd.f32 0.0, %v1449
    %1451 = vmatprep.mubr.f32.mxu0 0.0
    %1452 = vmatmul.mubr.f32.gmra.mrb[0].mxu0 %v38
    %v1453 = vpop.f32.mrb[0].mxu0
    %v1454 = vadd.f32 0.0, %v1453
    %v1455 = vpop.f32.mrb[0].mxu0
    %v1456 = vadd.f32 0.0, %v1455
    %1457 = vmatprep.mubr.f32.mxu0 0.0
    %1458 = vmatmul.mubr.f32.gmra.mrb[0].mxu0 %v39
    %v1459 = vpop.f32.mrb[0].mxu0
    %v1460 = vadd.f32 0.0, %v1459
    %v1461 = vpop.f32.mrb[0].mxu0
    %v1462 = vadd.f32 0.0, %v1461
    %1463 = vmatprep.mubr.f32.mxu0 0.0
    %1464 = vmatmul.mubr.f32.gmra.mrb[0].mxu0 %v40
    %v1465 = vpop.f32.mrb[0].mxu0
    %v1466 = vadd.f32 0.0, %v1465
    %v1467 = vpop.f32.mrb[0].mxu0
    %v1468 = vadd.f32 0.0, %v1467
    %1469 = vdwg.mxu0
    %v1470 = vsub.f32 %v1448, %v868
    %v1471 = vsub.f32 %v1450, %v869
    %v1472 = vsub.f32 %v1454, %v870
    %v1473 = vsub.f32 %v1456, %v871
    %v1474 = vsub.f32 %v1460, %v872
    %v1475 = vsub.f32 %v1462, %v873
    %v1476 = vsub.f32 %v1466, %v874
    %v1477 = vsub.f32 %v1468, %v875
    %v1478 = vmul.f32 %v1470, %v1470
    %v1479 = vmul.f32 %v1471, %v1471
    %v1480 = vmul.f32 %v1472, %v1472
    %v1481 = vmul.f32 %v1473, %v1473
    %v1482 = vmul.f32 %v1474, %v1474
    %v1483 = vmul.f32 %v1475, %v1475
    %v1484 = vmul.f32 %v1476, %v1476
    %v1485 = vmul.f32 %v1477, %v1477
    %v1486 = vadd.f32 %v1478, %v1480
    %v1487 = vadd.f32 %v1486, %v1482
    %v1488 = vadd.f32 %v1487, %v1484
    %v1489 = vrot.slane %v1488, 4
    %v1490 = vadd.f32 %v1488, %v1489
    %v1491 = vrot.slane %v1490, 2
    %v1492 = vadd.f32 %v1490, %v1491
    %v1493 = vrot.slane %v1492, 1
    %v1494 = vadd.f32 %v1492, %v1493
    %v1495 = vadd.f32 %v1479, %v1481
    %v1496 = vadd.f32 %v1495, %v1483
    %v1497 = vadd.f32 %v1496, %v1485
    %v1498 = vrot.slane %v1497, 4
    %v1499 = vadd.f32 %v1497, %v1498
    %v1500 = vrot.slane %v1499, 2
    %v1501 = vadd.f32 %v1499, %v1500
    %v1502 = vrot.slane %v1501, 1
    %v1503 = vadd.f32 %v1501, %v1502
    %v1504 = vadd.f32 %v829, %v1494
    %v1505 = vadd.f32 %v838, %v1503
    %s1506 = scalar_lea.vmem %s4, 64
    %1507 = vst [vmem:[%s1506] sm:$0xff] %v1448
    %1508 = vst [vmem:[%s1506 + $0x8] sm:$0xff] %v1450
    %1509 = vst [vmem:[%s1506 + $0x10] sm:$0xff] %v1454
    %1510 = vst [vmem:[%s1506 + $0x18] sm:$0xff] %v1456
    %1511 = vst [vmem:[%s1506 + $0x20] sm:$0xff] %v1460
    %1512 = vst [vmem:[%s1506 + $0x28] sm:$0xff] %v1462
    %1513 = vst [vmem:[%s1506 + $0x30] sm:$0xff] %v1466
    %1514 = vst [vmem:[%s1506 + $0x38] sm:$0xff] %v1468
    %v1515 = vcombine.low %v1245, %v1284
    %v1517 = vunpack.c.l.s4 1966171168
    %v1518 = vunpack.c.0.s8 %v1517
    %v1519 = vlaneseq
    %v1520 = vshrl.u32 %v1519, 7
    %v1521 = vsub.s32 %v1518, %v1520
    %v1522 = vrot.slane %v1515, %v1521
    %v1524 = vunpack.c.l.s4 1966171168
    %v1525 = vunpack.c.0.s8 %v1524
    %v1526 = vlaneseq
    %v1527 = vshrl.u32 %v1526, 7
    %v1528 = vsub.s32 %v1525, %v1527
    %v1529 = vrot.slane %v1522, %v1528
    %s1530 = scalar_lea.vmem [#allocation2], 2
    %1531 = vst.msk [vmem:[%s1530] sm:$0x3] %vm865, %v1529
    %v1534 = vcombine.low %v1504, %v1505
    %v1536 = vunpack.c.l.s4 1966171168
    %v1537 = vunpack.c.0.s8 %v1536
    %v1538 = vlaneseq
    %v1539 = vshrl.u32 %v1538, 7
    %v1540 = vsub.s32 %v1537, %v1539
    %v1541 = vrot.slane %v1534, %v1540
    %v1543 = vunpack.c.l.s4 1966171168
    %v1544 = vunpack.c.0.s8 %v1543
    %v1545 = vlaneseq
    %v1546 = vshrl.u32 %v1545, 7
    %v1547 = vsub.s32 %v1544, %v1546
    %v1548 = vrot.slane %v1541, %v1547
    %1550 = vst.msk [vmem:[%s6] sm:$0x3] %vm865, %v1548
    // Predicated region
    $region18: #{vector_quantize.1} parent=1 // pred_check
      _
    $region19: #{vector_quantize.1} parent=1 // pred_check_branch
      %1552 = sbr.rel (0) target = $region21
    $region20: #{vector_quantize.1} parent=1 // pred_region
      _
    $region21: #{vector_quantize.1} parent=1 // pred_fallthru
      _
    // Predicated region
    $region22: #{vector_quantize.1} parent=1 // pred_check
      _
    $region23: #{vector_quantize.1} parent=1 // pred_check_branch
      %1554 = sbr.rel (0) target = $region25
    $region24: #{vector_quantize.1} parent=1 // pred_region
      %s1556 = ssub.s32 64, 64
      %1557 = vsyncadd [#allocation3], %s1556
      %s1558 = sshll.u32 [#allocation2], 4
      %s1559 = int_to_ptr.vmem [resolvable:$true] %s1558
      %1564 = dma.vmem_to_hbm [thread:$0]  %s1559, 64, %s5, [#allocation3], 32, 32, 2
    $region25: #{vector_quantize.1} parent=1 // pred_fallthru
      _
    // Predicated region
    $region26: #{vector_quantize.1} parent=1 // pred_check
      _
    $region27: #{vector_quantize.1} parent=1 // pred_check_branch
      %1566 = sbr.rel (0) target = $region29
    $region28: #{vector_quantize.1} parent=1 // pred_region
      _
    $region29: #{vector_quantize.1} parent=1 // pred_fallthru
      _
    // Predicated region
    $region30: #{vector_quantize.1} parent=1 // pred_check
      _
    $region31: #{vector_quantize.1} parent=1 // pred_check_branch
      %1568 = sbr.rel (0) target = $region33
    $region32: #{vector_quantize.1} parent=1 // pred_region
      _
    $region33: #{vector_quantize.1} parent=1 // pred_fallthru
      _
    // Predicated region
    $region34: #{vector_quantize.1} parent=1 // pred_check
      _
    $region35: #{vector_quantize.1} parent=1 // pred_check_branch
      %1570 = sbr.rel (0) target = $region37
    $region36: #{vector_quantize.1} parent=1 // pred_region
      %1571 = dma.done [#allocation3], 64
    $region37: #{vector_quantize.1} parent=1 // pred_fallthru
      _
    // Predicated region
    $region38: #{vector_quantize.1} parent=1 // pred_check
      _
    $region39: #{vector_quantize.1} parent=1 // pred_check_branch
      %1573 = sbr.rel (0) target = $region41
    $region40: #{vector_quantize.1} parent=1 // pred_region
      _
    $region41: #{vector_quantize.1} parent=1 // pred_fallthru
      _
    %1574 = vsyncpa [#allocation3], 1

</llo_original>
